<compile_context>
chip_gen: v5e
topology: v5e:2x2
jax: 0.10.0
libtpu: 0.0.40
codegen_flags: <defaults>
</compile_context>

<pallas_src>
import jax
import jax.numpy as jnp
from jax.experimental import pallas as pl
from jax.experimental.pallas import tpu as pltpu

_MIN_B = 8      # sublane multiple for the query batch
_TILE_B = 256   # max query rows per grid step (fills MXU M, amortizes weight DMA)


def _net_kernel(key_ref, keys_t_ref, values_ref, keys2_t_ref, values2_ref, out_ref):
    # key_ref:     (B, 4)     f32   query rows
    # keys_t_ref:  (4, 50)    bf16  keys^T
    # values_ref:  (50, 256)  bf16  values  (250 -> 256 zero-padded)
    # keys2_t_ref: (256, 50)  bf16  keys2^T (250 -> 256 zero-padded)
    # values2_ref: (50, 2560) bf16  values2 (2500 -> 2560 zero-padded)
    # out_ref:     (B, 2560)  f32
    key = key_ref[...]                                                    # (B, 4) f32
    keys_t = keys_t_ref[...].astype(jnp.float32)                          # tiny (4, 50)

    # attention = softmax(key @ keys^T): 4 VPU broadcast-FMAs, lane-major (B, 50)
    logits = (key[:, 0:1] * keys_t[0:1, :]
              + key[:, 1:2] * keys_t[1:2, :]
              + key[:, 2:3] * keys_t[2:3, :]
              + key[:, 3:4] * keys_t[3:4, :])                             # (B, 50)
    logits = logits - jnp.max(logits, axis=-1, keepdims=True)
    e = jnp.exp(logits)
    attn = e / jnp.sum(e, axis=-1, keepdims=True)                         # (B, 50) f32

    # out1 = relu(attention @ values): bf16 operands straight into the MXU
    out1 = jnp.dot(attn.astype(jnp.bfloat16), values_ref[...],
                   preferred_element_type=jnp.float32)                    # (B, 256)
    out1 = jnp.maximum(out1, 0.0)

    # attention2 = softmax(out1 @ keys2^T)
    logits2 = jnp.dot(out1.astype(jnp.bfloat16), keys2_t_ref[...],
                      preferred_element_type=jnp.float32)                 # (B, 50)
    logits2 = logits2 - jnp.max(logits2, axis=-1, keepdims=True)
    e2 = jnp.exp(logits2)
    attn2 = e2 * pl.reciprocal(jnp.sum(e2, axis=-1, keepdims=True), approx=True)

    # out = sigmoid(attention2 @ values2), stable tanh form (EUP)
    out2 = jnp.dot(attn2.astype(jnp.bfloat16), values2_ref[...],
                   preferred_element_type=jnp.float32)                    # (B, 2560)
    out_ref[...] = 0.5 * jnp.tanh(0.5 * out2) + 0.5


def prep_params(keys, values, keys2, values2):
    """Transpose to lane-major, zero-pad to lane multiples, cast to bf16.

    Call ONCE and reuse the returned tuple for every forward call.
    """
    keys_t = jnp.asarray(keys, jnp.float32).T.astype(jnp.bfloat16)                     # (4, 50)
    values_p = jnp.pad(jnp.asarray(values, jnp.float32), ((0, 0), (0, 6))
                       ).astype(jnp.bfloat16)                                          # (50, 256)
    keys2_t = jnp.pad(jnp.asarray(keys2, jnp.float32), ((0, 0), (0, 6))
                      ).T.astype(jnp.bfloat16)                                         # (256, 50)
    values2_p = jnp.pad(jnp.asarray(values2, jnp.float32), ((0, 0), (0, 60))
                        ).astype(jnp.bfloat16)                                         # (50, 2560)
    return keys_t, values_p, keys2_t, values2_p


def _net_pallas(key_rows, params):
    """Run the kernel on (B, 4) query rows; returns (B, 2560) f32."""
    keys_t, values_p, keys2_t, values2_p = params
    b = key_rows.shape[0]

    # Tile the batch: one grid step for small B, ~_TILE_B rows per step otherwise.
    n_steps = -(-b // _TILE_B)
    tile_b = -(-b // n_steps)
    tile_b = -(-tile_b // _MIN_B) * _MIN_B
    b_pad = tile_b * n_steps
    if b_pad != b:
        key_rows = jnp.pad(key_rows, ((0, b_pad - b), (0, 0)))

    weight_spec = lambda shape: pl.BlockSpec(shape, lambda i: (0, 0))  # resident across steps
    out = pl.pallas_call(
        _net_kernel,
        out_shape=jax.ShapeDtypeStruct((b_pad, 2560), jnp.float32),
        grid=(n_steps,),
        in_specs=[
            pl.BlockSpec((tile_b, 4), lambda i: (i, 0)),
            weight_spec((4, 50)),
            weight_spec((50, 256)),
            weight_spec((256, 50)),
            weight_spec((50, 2560)),
        ],
        out_specs=pl.BlockSpec((tile_b, 2560), lambda i: (i, 0)),
        compiler_params=pltpu.CompilerParams(dimension_semantics=("parallel",)),
    )(key_rows, keys_t, values_p, keys2_t, values2_p)
    return out[:b]


@jax.jit
def net_forward(locations, params):
    """Pallas equivalent of Net.forward (single query). Returns (25, 25, 4) f32."""
    key_row = jnp.reshape(locations, (1, 4)).astype(jnp.float32)
    out = _net_pallas(key_row, params)
    return jnp.reshape(out[0, :2500], (25, 25, 4))


@jax.jit
def net_forward_batched(locations_batch, params):
    """Batched forward: locations_batch (B, ...) -> (B, 25, 25, 4)."""
    b = locations_batch.shape[0]
    key_rows = jnp.reshape(locations_batch, (b, 4)).astype(jnp.float32)
    out = _net_pallas(key_rows, params)
    return jnp.reshape(out[:, :2500], (b, 25, 25, 4))


def _reference(locations, keys, values, keys2, values2):
    """Pure-JAX reference with the same bf16 weight/activation quantization."""
    bf = lambda x: x.astype(jnp.bfloat16)
    kb, vb, k2b, v2b = bf(keys), bf(values), bf(keys2), bf(values2)
    key = jnp.reshape(locations, (-1,)).astype(jnp.float32)
    logits = kb.astype(jnp.float32) @ key
    attn = jax.nn.softmax(logits, axis=0)
    out1 = jnp.maximum(jnp.dot(bf(attn), vb, preferred_element_type=jnp.float32), 0.0)
    logits2 = jnp.dot(k2b, bf(out1), preferred_element_type=jnp.float32)
    attn2 = jax.nn.softmax(logits2, axis=0)
    out2 = jnp.dot(bf(attn2), v2b, preferred_element_type=jnp.float32)
    return jnp.reshape(jax.nn.sigmoid(out2), (25, 25, 4))


if __name__ == "__main__":
    root = jax.random.PRNGKey(0)
    k_loc, k_keys, k_keys2, k_vals, k_vals2, k_batch = jax.random.split(root, 6)

    # locations flattens to a length-4 vector (keys has 4 columns)
    locations = jax.random.normal(k_loc, (2, 2), dtype=jnp.float32)
    keys = jax.random.normal(k_keys, (50, 4), dtype=jnp.float32)
    keys2 = jax.random.normal(k_keys2, (50, 250), dtype=jnp.float32)
    values = jax.random.normal(k_vals, (50, 250), dtype=jnp.float32)
    values2 = jax.random.normal(k_vals2, (50, 2500), dtype=jnp.float32)

    # Prep the weights ONCE; reuse for every forward call.
    params = prep_params(keys, values, keys2, values2)

    # Single-query forward (matches Net.forward semantics).
    out = jax.block_until_ready(net_forward(locations, params))
    ref = _reference(locations, keys, values, keys2, values2)
    assert out.shape == (25, 25, 4)
    assert jnp.allclose(out, ref, atol=5e-3, rtol=0.0), "single-query mismatch vs reference"

    # Batched forward: B=300 queries -> two parallel grid steps, weights resident.
    B = 300
    locs_b = jax.random.normal(k_batch, (B, 2, 2), dtype=jnp.float32)
    out_b = jax.block_until_ready(net_forward_batched(locs_b, params))
    assert out_b.shape == (B, 25, 25, 4)
    ref_b = jax.vmap(_reference, in_axes=(0, None, None, None, None))(
        locs_b, keys, values, keys2, values2)
    assert jnp.allclose(out_b, ref_b, atol=5e-3, rtol=0.0), "batched mismatch vs reference"

    print("KERNEL_OK")
</pallas_src>

<mosaic_0001>
module attributes {stable_mosaic.version = 11 : i64} {
  func.func @_net_kernel(%arg0: i32, %arg1: memref<8x4xf32, #tpu.memory_space<vmem>>, %arg2: memref<4x50xbf16, #tpu.memory_space<vmem>>, %arg3: memref<50x256xbf16, #tpu.memory_space<vmem>>, %arg4: memref<256x50xbf16, #tpu.memory_space<vmem>>, %arg5: memref<50x2560xbf16, #tpu.memory_space<vmem>>, %arg6: memref<8x2560xf32, #tpu.memory_space<vmem>>) attributes {dimension_semantics = [#tpu.dimension_semantics<parallel>], iteration_bounds = array<i64: 1>, scalar_prefetch = 0 : i64, scratch_operands = 0 : i64, tpu.core_type = #tpu.core_type<tc>, window_params = [{transform_indices = @transform_0, window_bounds = array<i64: 8, 4>}, {pipeline_mode = #tpu.pipeline_mode<synchronous>, transform_indices = @transform_1, window_bounds = array<i64: 4, 50>}, {pipeline_mode = #tpu.pipeline_mode<synchronous>, transform_indices = @transform_2, window_bounds = array<i64: 50, 256>}, {pipeline_mode = #tpu.pipeline_mode<synchronous>, transform_indices = @transform_3, window_bounds = array<i64: 256, 50>}, {pipeline_mode = #tpu.pipeline_mode<synchronous>, transform_indices = @transform_4, window_bounds = array<i64: 50, 2560>}, {transform_indices = @transform_5, window_bounds = array<i64: 8, 2560>}]} {
    %c0 = arith.constant 0 : index
    %c0_0 = arith.constant 0 : index
    %0 = vector.load %arg1[%c0, %c0_0] : memref<8x4xf32, #tpu.memory_space<vmem>>, vector<8x4xf32>
    %c0_1 = arith.constant 0 : index
    %c0_2 = arith.constant 0 : index
    %1 = vector.load %arg2[%c0_1, %c0_2] : memref<4x50xbf16, #tpu.memory_space<vmem>>, vector<4x50xbf16>
    %2 = arith.extf %1 : vector<4x50xbf16> to vector<4x50xf32>
    %3 = vector.extract_strided_slice %0 {offsets = [0, 0], sizes = [8, 1], strides = [1, 1]} : vector<8x4xf32> to vector<8x1xf32>
    %4 = vector.extract_strided_slice %2 {offsets = [0, 0], sizes = [1, 50], strides = [1, 1]} : vector<4x50xf32> to vector<1x50xf32>
    %5 = vector.broadcast %3 : vector<8x1xf32> to vector<8x50xf32>
    %6 = vector.broadcast %4 : vector<1x50xf32> to vector<8x50xf32>
    %7 = arith.mulf %5, %6 : vector<8x50xf32>
    %8 = vector.extract_strided_slice %0 {offsets = [0, 1], sizes = [8, 1], strides = [1, 1]} : vector<8x4xf32> to vector<8x1xf32>
    %9 = vector.extract_strided_slice %2 {offsets = [1, 0], sizes = [1, 50], strides = [1, 1]} : vector<4x50xf32> to vector<1x50xf32>
    %10 = vector.broadcast %8 : vector<8x1xf32> to vector<8x50xf32>
    %11 = vector.broadcast %9 : vector<1x50xf32> to vector<8x50xf32>
    %12 = arith.mulf %10, %11 : vector<8x50xf32>
    %13 = arith.addf %7, %12 : vector<8x50xf32>
    %14 = vector.extract_strided_slice %0 {offsets = [0, 2], sizes = [8, 1], strides = [1, 1]} : vector<8x4xf32> to vector<8x1xf32>
    %15 = vector.extract_strided_slice %2 {offsets = [2, 0], sizes = [1, 50], strides = [1, 1]} : vector<4x50xf32> to vector<1x50xf32>
    %16 = vector.broadcast %14 : vector<8x1xf32> to vector<8x50xf32>
    %17 = vector.broadcast %15 : vector<1x50xf32> to vector<8x50xf32>
    %18 = arith.mulf %16, %17 : vector<8x50xf32>
    %19 = arith.addf %13, %18 : vector<8x50xf32>
    %20 = vector.extract_strided_slice %0 {offsets = [0, 3], sizes = [8, 1], strides = [1, 1]} : vector<8x4xf32> to vector<8x1xf32>
    %21 = vector.extract_strided_slice %2 {offsets = [3, 0], sizes = [1, 50], strides = [1, 1]} : vector<4x50xf32> to vector<1x50xf32>
    %22 = vector.broadcast %20 : vector<8x1xf32> to vector<8x50xf32>
    %23 = vector.broadcast %21 : vector<1x50xf32> to vector<8x50xf32>
    %24 = arith.mulf %22, %23 : vector<8x50xf32>
    %25 = arith.addf %19, %24 : vector<8x50xf32>
    %cst = arith.constant dense<0xFF800000> : vector<8xf32>
    %26 = vector.multi_reduction <maximumf>, %25, %cst [1] : vector<8x50xf32> to vector<8xf32>
    %27 = vector.shape_cast %26 : vector<8xf32> to vector<8x1xf32>
    %28 = vector.broadcast %27 : vector<8x1xf32> to vector<8x50xf32>
    %29 = arith.subf %25, %28 : vector<8x50xf32>
    %30 = math.exp %29 : vector<8x50xf32>
    %cst_3 = arith.constant dense<0.000000e+00> : vector<8xf32>
    %31 = vector.multi_reduction <add>, %30, %cst_3 [1] : vector<8x50xf32> to vector<8xf32>
    %32 = vector.shape_cast %31 : vector<8xf32> to vector<8x1xf32>
    %33 = vector.broadcast %32 : vector<8x1xf32> to vector<8x50xf32>
    %34 = arith.divf %30, %33 : vector<8x50xf32>
    %35 = arith.truncf %34 : vector<8x50xf32> to vector<8x50xbf16>
    %c0_4 = arith.constant 0 : index
    %c0_5 = arith.constant 0 : index
    %36 = vector.load %arg3[%c0_4, %c0_5] : memref<50x256xbf16, #tpu.memory_space<vmem>>, vector<50x256xbf16>
    %cst_6 = arith.constant dense<0.000000e+00> : vector<8x256xf32>
    %37 = tpu.matmul %35, %36, %cst_6 {dimension_numbers = #tpu.dot_dimension_numbers<[1], [0], [0], [1], [0, 0, 1, 1], [], []>} : vector<8x50xbf16>, vector<50x256xbf16>, vector<8x256xf32> -> vector<8x256xf32>
    %cst_7 = arith.constant 0.000000e+00 : f32
    %38 = vector.broadcast %cst_7 : f32 to vector<8x256xf32>
    %39 = arith.maximumf %37, %38 : vector<8x256xf32>
    %40 = arith.truncf %39 : vector<8x256xf32> to vector<8x256xbf16>
    %c0_8 = arith.constant 0 : index
    %c0_9 = arith.constant 0 : index
    %41 = vector.load %arg4[%c0_8, %c0_9] : memref<256x50xbf16, #tpu.memory_space<vmem>>, vector<256x50xbf16>
    %cst_10 = arith.constant dense<0.000000e+00> : vector<8x50xf32>
    %42 = tpu.matmul %40, %41, %cst_10 {dimension_numbers = #tpu.dot_dimension_numbers<[1], [0], [0], [1], [0, 0, 1, 1], [], []>} : vector<8x256xbf16>, vector<256x50xbf16>, vector<8x50xf32> -> vector<8x50xf32>
    %cst_11 = arith.constant dense<0xFF800000> : vector<8xf32>
    %43 = vector.multi_reduction <maximumf>, %42, %cst_11 [1] : vector<8x50xf32> to vector<8xf32>
    %44 = vector.shape_cast %43 : vector<8xf32> to vector<8x1xf32>
    %45 = vector.broadcast %44 : vector<8x1xf32> to vector<8x50xf32>
    %46 = arith.subf %42, %45 : vector<8x50xf32>
    %47 = math.exp %46 : vector<8x50xf32>
    %cst_12 = arith.constant dense<0.000000e+00> : vector<8xf32>
    %48 = vector.multi_reduction <add>, %47, %cst_12 [1] : vector<8x50xf32> to vector<8xf32>
    %49 = vector.shape_cast %48 : vector<8xf32> to vector<8x1xf32>
    %50 = tpu.reciprocal %49 {approx = true} : vector<8x1xf32> -> vector<8x1xf32>
    %51 = vector.broadcast %50 : vector<8x1xf32> to vector<8x50xf32>
    %52 = arith.mulf %47, %51 : vector<8x50xf32>
    %53 = arith.truncf %52 : vector<8x50xf32> to vector<8x50xbf16>
    %c0_13 = arith.constant 0 : index
    %c0_14 = arith.constant 0 : index
    %54 = vector.load %arg5[%c0_13, %c0_14] : memref<50x2560xbf16, #tpu.memory_space<vmem>>, vector<50x2560xbf16>
    %cst_15 = arith.constant dense<0.000000e+00> : vector<8x2560xf32>
    %55 = tpu.matmul %53, %54, %cst_15 {dimension_numbers = #tpu.dot_dimension_numbers<[1], [0], [0], [1], [0, 0, 1, 1], [], []>} : vector<8x50xbf16>, vector<50x2560xbf16>, vector<8x2560xf32> -> vector<8x2560xf32>
    %cst_16 = arith.constant 5.000000e-01 : f32
    %56 = vector.broadcast %cst_16 : f32 to vector<8x2560xf32>
    %57 = arith.mulf %56, %55 : vector<8x2560xf32>
    %58 = math.tanh %57 : vector<8x2560xf32>
    %cst_17 = arith.constant 5.000000e-01 : f32
    %59 = vector.broadcast %cst_17 : f32 to vector<8x2560xf32>
    %60 = arith.mulf %59, %58 : vector<8x2560xf32>
    %cst_18 = arith.constant 5.000000e-01 : f32
    %61 = vector.broadcast %cst_18 : f32 to vector<8x2560xf32>
    %62 = arith.addf %60, %61 : vector<8x2560xf32>
    %c0_19 = arith.constant 0 : index
    %c0_20 = arith.constant 0 : index
    %63 = vector.load %arg6[%c0_19, %c0_20] : memref<8x2560xf32, #tpu.memory_space<vmem>>, vector<8x2560xf32>
    tpu.vector_store %arg6[%c0_19, %c0_20], %62 {strides = array<i32>} : memref<8x2560xf32, #tpu.memory_space<vmem>>, vector<8x2560xf32>,
    return
  }
  func.func @transform_0(%arg0: i32) -> (i32, i32) {
    %c0_i32 = arith.constant 0 : i32
    %c0_i32_0 = arith.constant 0 : i32
    return %arg0, %c0_i32 : i32, i32
  }
  func.func @transform_1(%arg0: i32) -> (i32, i32) {
    %c0_i32 = arith.constant 0 : i32
    %c0_i32_0 = arith.constant 0 : i32
    %c0_i32_1 = arith.constant 0 : i32
    return %c0_i32, %c0_i32_0 : i32, i32
  }
  func.func @transform_2(%arg0: i32) -> (i32, i32) {
    %c0_i32 = arith.constant 0 : i32
    %c0_i32_0 = arith.constant 0 : i32
    %c0_i32_1 = arith.constant 0 : i32
    return %c0_i32, %c0_i32_0 : i32, i32
  }
  func.func @transform_3(%arg0: i32) -> (i32, i32) {
    %c0_i32 = arith.constant 0 : i32
    %c0_i32_0 = arith.constant 0 : i32
    %c0_i32_1 = arith.constant 0 : i32
    return %c0_i32, %c0_i32_0 : i32, i32
  }
  func.func @transform_4(%arg0: i32) -> (i32, i32) {
    %c0_i32 = arith.constant 0 : i32
    %c0_i32_0 = arith.constant 0 : i32
    %c0_i32_1 = arith.constant 0 : i32
    return %c0_i32, %c0_i32_0 : i32, i32
  }
  func.func @transform_5(%arg0: i32) -> (i32, i32) {
    %c0_i32 = arith.constant 0 : i32
    %c0_i32_0 = arith.constant 0 : i32
    return %arg0, %c0_i32 : i32, i32
  }
}

</mosaic_0001>

<llo_original>
// kernel: squeeze.1
$region0: #{squeeze.1}
  %s0 = inlined_call_operand.vmem [shape: f32[2500], index: 0, kind: input, shape index: {}]
  %s1 = inlined_call_operand.vmem [shape: f32[25,25,4], index: 1, kind: output, shape index: {}]
  %v2 = vld [vmem:[%s0] sm:$0xff]
  %vm3 = vcmask 31744
  %4 = vst.msk [vmem:[%s1] ss:$39 sm:$0xf] %vm3, %v2
  %s5 = scalar_lea.vmem %s1, 7
  %6 = vst.msk [vmem:[%s5] ss:$39 sm:$0xf0] %vm3, %v2
  %s7 = scalar_lea.vmem %s0, 8
  %v8 = vld [vmem:[%s7] sm:$0xff]
  %vm9 = vcmask 31744
  %s10 = scalar_lea.vmem %s1, 326
  %11 = vst.msk [vmem:[%s10] ss:$39 sm:$0x7] %vm9, %v8
  %s12 = scalar_lea.vmem %s1, 333
  %13 = vst.msk [vmem:[%s12] ss:$39 sm:$0x78] %vm9, %v8
  %s14 = scalar_lea.vmem %s1, 606
  %15 = vst.msk [vmem:[%s14] sm:$0x80] %vm9, %v8
  %s16 = scalar_lea.vmem %s0, 16
  %v17 = vld [vmem:[%s16] sm:$0xf]
  %vm18 = vcmask 31744
  %s19 = scalar_lea.vmem %s1, 652
  %20 = vst.msk [vmem:[%s19] ss:$39 sm:$0x3] %vm18, %v17
  %s21 = scalar_lea.vmem %s1, 659
  %22 = vst.msk [vmem:[%s21] ss:$39 sm:$0xc] %vm18, %v17
  %s23 = scalar_lea.vmem %s0, 7
  %s24 = smov 3
  %v25 = vld [vmem:[%s23] ss:$-7 sm:%s24]
  %s26 = scalar_lea.vmem %s0, 4
  %v27 = vld.sshfl [vmem:[%s26] sm:$0xff pattern:$0x44b07eee]
  %vm28 = vcmask 1046530
  %v29 = vsel %vm28, %v27, %v25
  %s30 = scalar_lea.vmem %s0, 4294967290
  %v31 = vld [vmem:[%s30] sm:$0x80]
  %vm32 = vcmask 1047559
  %v33 = vsel %vm32, %v31, %v29
  %34 = vrot.lane.b32.xlu0 %v33, 124
  %v35 = vpop.permute.xlu0 %34
  %vm36 = vcmask 31744
  %s37 = scalar_lea.vmem %s1, 288
  %38 = vst.msk [vmem:[%s37] ss:$-287 sm:$0x3] %vm36, %v35
  %s39 = scalar_lea.vmem %s1, 1312
  %40 = vst.msk [vmem:[%s39] ss:$-287 sm:$0x1c] %vm36, %v35
  %s41 = scalar_lea.vmem %s1, 2049
  %42 = vst.msk [vmem:[%s41] ss:$-287 sm:$0xe0] %vm36, %v35
  %s43 = scalar_lea.vmem %s0, 5
  %v44 = vld.sshfl [vmem:[%s43] sm:$0xff pattern:$0x4444b07e]
  %s45 = scalar_lea.vmem %s0, 2
  %v46 = vld.sshfl [vmem:[%s45] sm:$0xff pattern:$0x4b000000]
  %vm47 = vcmask 1047557
  %v48 = vsel %vm47, %v46, %v44
  %49 = vrot.lane.b32.xlu0 %v48, 124
  %v50 = vpop.permute.xlu0 %49
  %vm51 = vcmask 31744
  %s52 = scalar_lea.vmem %s1, 777
  %53 = vst.msk [vmem:[%s52] ss:$-287 sm:$0x7] %vm51, %v50
  %s54 = scalar_lea.vmem %s1, 1514
  %55 = vst.msk [vmem:[%s54] ss:$-287 sm:$0x38] %vm51, %v50
  %s56 = scalar_lea.vmem %s1, 2251
  %57 = vst.msk [vmem:[%s56] ss:$-287 sm:$0xc0] %vm51, %v50
  %s58 = scalar_lea.vmem %s0, 3
  %v59 = vld.sshfl [vmem:[%s58] sm:$0xff pattern:$0xbbbbb07e]
  %60 = vrot.lane.b32.xlu0 %v59, 124
  %v61 = vpop.permute.xlu0 %60
  %vm62 = vcmask 31744
  %s63 = scalar_lea.vmem %s1, 692
  %64 = vst.msk [vmem:[%s63] ss:$-287 sm:$0x7] %vm62, %v61
  %s65 = scalar_lea.vmem %s1, 565
  %66 = vst.msk [vmem:[%s65] sm:$0x8] %vm62, %v61
  %s67 = scalar_lea.vmem %s0, 14
  %v68 = vld [vmem:[%s67] ss:$-7 sm:$0x7]
  %s69 = scalar_lea.vmem %s0, 4
  %v70 = vld.sshfl [vmem:[%s69] sm:$0xff pattern:$0x4b07eeee]
  %vm71 = vcmask 1047555
  %v72 = vsel %vm71, %v70, %v68
  %73 = vrot.lane.b32.xlu0 %v72, 120
  %v74 = vpop.permute.xlu0 %73
  %vm75 = vcmask 31744
  %s76 = scalar_lea.vmem %s1, 576
  %77 = vst.msk [vmem:[%s76] ss:$-287 sm:$0x7] %vm75, %v74
  %s78 = scalar_lea.vmem %s1, 1600
  %79 = vst.msk [vmem:[%s78] ss:$-287 sm:$0x38] %vm75, %v74
  %s80 = scalar_lea.vmem %s1, 2337
  %81 = vst.msk [vmem:[%s80] ss:$-287 sm:$0xc0] %vm75, %v74
  %s82 = scalar_lea.vmem %s0, 1
  %s83 = smov 3
  %v84 = vld [vmem:[%s82] ss:$18 sm:%s83]
  %s85 = scalar_lea.vmem %s0, 2
  %v86 = vld.sshfl [vmem:[%s85] sm:$0xff pattern:$0xb07e3aaa]
  %vm87 = vcmask 1047554
  %v88 = vsel %vm87, %v86, %v84
  %89 = vrot.lane.b32.xlu0 %v88, 120
  %v90 = vpop.permute.xlu0 %89
  %vm91 = vcmask 31744
  %s92 = scalar_lea.vmem %s1, 41
  %93 = vst.msk [vmem:[%s92] ss:$737 sm:$0x3] %vm91, %v90
  %s94 = scalar_lea.vmem %s1, 1065
  %95 = vst.msk [vmem:[%s94] ss:$-287 sm:$0xc] %vm91, %v90
  %s96 = scalar_lea.vmem %s1, 1802
  %97 = vst.msk [vmem:[%s96] ss:$-287 sm:$0x70] %vm91, %v90
  %s98 = scalar_lea.vmem %s1, 523
  %99 = vst.msk [vmem:[%s98] sm:$0x80] %vm91, %v90
  %s100 = scalar_lea.vmem %s0, 3
  %v101 = vld.sshfl [vmem:[%s100] sm:$0xff pattern:$0x7e3]
  %102 = vrot.lane.b32.xlu0 %v101, 120
  %v103 = vpop.permute.xlu0 %102
  %vm104 = vcmask 31744
  %s105 = scalar_lea.vmem %s1, 243
  %106 = vst.msk [vmem:[%s105] ss:$450 sm:$0x3] %vm104, %v103
  %s107 = scalar_lea.vmem %s1, 980
  %108 = vst.msk [vmem:[%s107] ss:$-287 sm:$0xc] %vm104, %v103
  %s109 = scalar_lea.vmem %s0, 14
  %v110 = vld [vmem:[%s109] ss:$-7 sm:$0x7]
  %s111 = scalar_lea.vmem %s0, 4
  %v112 = vld.sshfl [vmem:[%s111] sm:$0xff pattern:$0x4b07eeee]
  %vm113 = vcmask 1047555
  %v114 = vsel %vm113, %v112, %v110
  %115 = vrot.lane.b32.xlu0 %v114, 116
  %v116 = vpop.permute.xlu0 %115
  %vm117 = vcmask 31744
  %s118 = scalar_lea.vmem %s1, 577
  %119 = vst.msk [vmem:[%s118] ss:$-287 sm:$0x7] %vm117, %v116
  %s120 = scalar_lea.vmem %s1, 1601
  %121 = vst.msk [vmem:[%s120] ss:$-287 sm:$0x38] %vm117, %v116
  %s122 = scalar_lea.vmem %s1, 2338
  %123 = vst.msk [vmem:[%s122] ss:$-287 sm:$0xc0] %vm117, %v116
  %s124 = scalar_lea.vmem %s0, 1
  %s125 = smov 3
  %v126 = vld [vmem:[%s124] ss:$18 sm:%s125]
  %s127 = scalar_lea.vmem %s0, 2
  %v128 = vld.sshfl [vmem:[%s127] sm:$0xff pattern:$0xb07e3aaa]
  %vm129 = vcmask 1047554
  %v130 = vsel %vm129, %v128, %v126
  %131 = vrot.lane.b32.xlu0 %v130, 116
  %v132 = vpop.permute.xlu0 %131
  %vm133 = vcmask 31744
  %s134 = scalar_lea.vmem %s1, 42
  %135 = vst.msk [vmem:[%s134] ss:$737 sm:$0x3] %vm133, %v132
  %s136 = scalar_lea.vmem %s1, 1066
  %137 = vst.msk [vmem:[%s136] ss:$-287 sm:$0xc] %vm133, %v132
  %s138 = scalar_lea.vmem %s1, 1803
  %139 = vst.msk [vmem:[%s138] ss:$-287 sm:$0x70] %vm133, %v132
  %s140 = scalar_lea.vmem %s1, 524
  %141 = vst.msk [vmem:[%s140] sm:$0x80] %vm133, %v132
  %s142 = scalar_lea.vmem %s0, 3
  %v143 = vld.sshfl [vmem:[%s142] sm:$0xff pattern:$0x7e3]
  %144 = vrot.lane.b32.xlu0 %v143, 116
  %v145 = vpop.permute.xlu0 %144
  %vm146 = vcmask 31744
  %s147 = scalar_lea.vmem %s1, 244
  %148 = vst.msk [vmem:[%s147] ss:$450 sm:$0x3] %vm146, %v145
  %s149 = scalar_lea.vmem %s1, 981
  %150 = vst.msk [vmem:[%s149] ss:$-287 sm:$0xc] %vm146, %v145
  %v151 = vld.sshfl [vmem:[%s0] sm:$0xff pattern:$0x7e3]
  %s152 = scalar_lea.vmem %s0, 4
  %v153 = vld.sshfl [vmem:[%s152] sm:$0xff pattern:$0xb07eeeee]
  %vm154 = vcmask 1047556
  %v155 = vsel %vm154, %v153, %v151
  %156 = vrot.lane.b32.xlu0 %v155, 112
  %v157 = vpop.permute.xlu0 %156
  %vm158 = vcmask 31744
  %s159 = scalar_lea.vmem %s1, 128
  %160 = vst.msk [vmem:[%s159] ss:$450 sm:$0x3] %vm158, %v157
  %s161 = scalar_lea.vmem %s1, 865
  %162 = vst.msk [vmem:[%s161] ss:$-287 sm:$0xc] %vm158, %v157
  %s163 = scalar_lea.vmem %s1, 1889
  %164 = vst.msk [vmem:[%s163] ss:$-287 sm:$0x70] %vm158, %v157
  %s165 = scalar_lea.vmem %s1, 610
  %166 = vst.msk [vmem:[%s165] sm:$0x80] %vm158, %v157
  %s167 = scalar_lea.vmem %s0, 8
  %s168 = smov 3
  %v169 = vld [vmem:[%s167] ss:$-7 sm:%s168]
  %s170 = scalar_lea.vmem %s0, 5
  %v171 = vld.sshfl [vmem:[%s170] sm:$0xff pattern:$0x44b07eee]
  %vm172 = vcmask 1046530
  %v173 = vsel %vm172, %v171, %v169
  %s174 = scalar_lea.vmem %s0, 4294967291
  %v175 = vld [vmem:[%s174] sm:$0x80]
  %vm176 = vcmask 1047559
  %v177 = vsel %vm176, %v175, %v173
  %178 = vrot.lane.b32.xlu0 %v177, 112
  %v179 = vpop.permute.xlu0 %178
  %vm180 = vcmask 31744
  %s181 = scalar_lea.vmem %s1, 330
  %182 = vst.msk [vmem:[%s181] ss:$-287 sm:$0x3] %vm180, %v179
  %s183 = scalar_lea.vmem %s1, 1354
  %184 = vst.msk [vmem:[%s183] ss:$-287 sm:$0x1c] %vm180, %v179
  %s185 = scalar_lea.vmem %s1, 2091
  %186 = vst.msk [vmem:[%s185] ss:$-287 sm:$0xe0] %vm180, %v179
  %s187 = scalar_lea.vmem %s0, 6
  %v188 = vld.sshfl [vmem:[%s187] sm:$0xff pattern:$0x44444b07]
  %189 = vrot.lane.b32.xlu0 %v188, 112
  %v190 = vpop.permute.xlu0 %189
  %vm191 = vcmask 31744
  %s192 = scalar_lea.vmem %s1, 532
  %193 = vst.msk [vmem:[%s192] ss:$-287 sm:$0x3] %vm191, %v190
  %s194 = scalar_lea.vmem %s1, 1269
  %195 = vst.msk [vmem:[%s194] ss:$-287 sm:$0xc] %vm191, %v190
  %v196 = vld.sshfl [vmem:[%s0] sm:$0xff pattern:$0x7e3a]
  %s197 = scalar_lea.vmem %s0, 53
  %v198 = vld [vmem:[%s197] ss:$-7 sm:$0xe0]
  %vm199 = vcmask 1047557
  %v200 = vsel %vm199, %v198, %v196
  %201 = vrot.lane.b32.xlu0 %v200, 108
  %v202 = vpop.permute.xlu0 %201
  %vm203 = vcmask 31744
  %s204 = scalar_lea.vmem %s1, 416
  %205 = vst.msk [vmem:[%s204] ss:$-287 sm:$0x3] %vm203, %v202
  %s206 = scalar_lea.vmem %s1, 1153
  %207 = vst.msk [vmem:[%s206] ss:$-287 sm:$0x1c] %vm203, %v202
  %s208 = scalar_lea.vmem %s1, 2177
  %209 = vst.msk [vmem:[%s208] ss:$-287 sm:$0xe0] %vm203, %v202
  %s210 = scalar_lea.vmem %s0, 15
  %v211 = vld [vmem:[%s210] ss:$-7 sm:$0x7]
  %s212 = scalar_lea.vmem %s0, 5
  %v213 = vld.sshfl [vmem:[%s212] sm:$0xff pattern:$0x4b07eeee]
  %vm214 = vcmask 1047555
  %v215 = vsel %vm214, %v213, %v211
  %216 = vrot.lane.b32.xlu0 %v215, 108
  %v217 = vpop.permute.xlu0 %216
  %vm218 = vcmask 31744
  %s219 = scalar_lea.vmem %s1, 618
  %220 = vst.msk [vmem:[%s219] ss:$-287 sm:$0x7] %vm218, %v217
  %s221 = scalar_lea.vmem %s1, 1642
  %222 = vst.msk [vmem:[%s221] ss:$-287 sm:$0x38] %vm218, %v217
  %s223 = scalar_lea.vmem %s1, 2379
  %224 = vst.msk [vmem:[%s223] ss:$-287 sm:$0xc0] %vm218, %v217
  %s225 = scalar_lea.vmem %s0, 2
  %v226 = vld.sshfl [vmem:[%s225] sm:$0xff pattern:$0xfffff4b0]
  %227 = vrot.lane.b32.xlu0 %v226, 108
  %v228 = vpop.permute.xlu0 %227
  %vm229 = vcmask 31744
  %s230 = scalar_lea.vmem %s1, 83
  %231 = vst.msk [vmem:[%s230] ss:$450 sm:$0x3] %vm229, %v228
  %s232 = scalar_lea.vmem %s1, 4294966642
  %233 = vst.msk [vmem:[%s232] ss:$450 sm:$0xc] %vm229, %v228
  %s234 = scalar_lea.vmem %s0, 3
  %v235 = vld.sshfl [vmem:[%s234] sm:$0xff pattern:$0x4444b07e]
  %s236 = scalar_lea.vmem %s0, 4294967206
  %s237 = smov 96
  %v238 = vld [vmem:[%s236] ss:$18 sm:%s237]
  %vm239 = vcmask 1046533
  %v240 = vsel %vm239, %v238, %v235
  %s241 = scalar_lea.vmem %s0, 4
  %v242 = vld [vmem:[%s241] sm:$0x80]
  %vm243 = vcmask 1047559
  %v244 = vsel %vm243, %v242, %v240
  %245 = vrot.lane.b32.xlu0 %v244, 104
  %v246 = vpop.permute.xlu0 %245
  %vm247 = vcmask 31744
  %s248 = scalar_lea.vmem %s1, 704
  %249 = vst.msk [vmem:[%s248] ss:$-287 sm:$0x7] %vm247, %v246
  %s250 = scalar_lea.vmem %s1, 1441
  %251 = vst.msk [vmem:[%s250] ss:$-287 sm:$0x38] %vm247, %v246
  %s252 = scalar_lea.vmem %s1, 2465
  %253 = vst.msk [vmem:[%s252] ss:$-287 sm:$0xc0] %vm247, %v246
  %s254 = scalar_lea.vmem %s0, 1
  %v255 = vld.sshfl [vmem:[%s254] sm:$0xff pattern:$0x7e3]
  %s256 = scalar_lea.vmem %s0, 5
  %v257 = vld.sshfl [vmem:[%s256] sm:$0xff pattern:$0xb07eeeee]
  %vm258 = vcmask 1047556
  %v259 = vsel %vm258, %v257, %v255
  %260 = vrot.lane.b32.xlu0 %v259, 104
  %v261 = vpop.permute.xlu0 %260
  %vm262 = vcmask 31744
  %s263 = scalar_lea.vmem %s1, 169
  %264 = vst.msk [vmem:[%s263] ss:$450 sm:$0x3] %vm262, %v261
  %s265 = scalar_lea.vmem %s1, 906
  %266 = vst.msk [vmem:[%s265] ss:$-287 sm:$0xc] %vm262, %v261
  %s267 = scalar_lea.vmem %s1, 1930
  %268 = vst.msk [vmem:[%s267] ss:$-287 sm:$0x70] %vm262, %v261
  %s269 = scalar_lea.vmem %s1, 651
  %270 = vst.msk [vmem:[%s269] sm:$0x80] %vm262, %v261
  %s271 = scalar_lea.vmem %s0, 2
  %v272 = vld.sshfl [vmem:[%s271] sm:$0xff pattern:$0x44444b07]
  %273 = vrot.lane.b32.xlu0 %v272, 104
  %v274 = vpop.permute.xlu0 %273
  %vm275 = vcmask 31744
  %s276 = scalar_lea.vmem %s1, 371
  %277 = vst.msk [vmem:[%s276] ss:$-287 sm:$0x3] %vm275, %v274
  %s278 = scalar_lea.vmem %s1, 1108
  %279 = vst.msk [vmem:[%s278] ss:$-287 sm:$0xc] %vm275, %v274
  %s280 = scalar_lea.vmem %s0, 3
  %v281 = vld.sshfl [vmem:[%s280] sm:$0xff pattern:$0x4444b07e]
  %s282 = scalar_lea.vmem %s0, 4294967206
  %s283 = smov 96
  %v284 = vld [vmem:[%s282] ss:$18 sm:%s283]
  %vm285 = vcmask 1046533
  %v286 = vsel %vm285, %v284, %v281
  %s287 = scalar_lea.vmem %s0, 4
  %v288 = vld [vmem:[%s287] sm:$0x80]
  %vm289 = vcmask 1047559
  %v290 = vsel %vm289, %v288, %v286
  %291 = vrot.lane.b32.xlu0 %v290, 100
  %v292 = vpop.permute.xlu0 %291
  %vm293 = vcmask 31744
  %s294 = scalar_lea.vmem %s1, 705
  %295 = vst.msk [vmem:[%s294] ss:$-287 sm:$0x7] %vm293, %v292
  %s296 = scalar_lea.vmem %s1, 1442
  %297 = vst.msk [vmem:[%s296] ss:$-287 sm:$0x38] %vm293, %v292
  %s298 = scalar_lea.vmem %s1, 2466
  %299 = vst.msk [vmem:[%s298] ss:$-287 sm:$0xc0] %vm293, %v292
  %s300 = scalar_lea.vmem %s0, 1
  %v301 = vld.sshfl [vmem:[%s300] sm:$0xff pattern:$0x7e3]
  %s302 = scalar_lea.vmem %s0, 5
  %v303 = vld.sshfl [vmem:[%s302] sm:$0xff pattern:$0xb07eeeee]
  %vm304 = vcmask 1047556
  %v305 = vsel %vm304, %v303, %v301
  %306 = vrot.lane.b32.xlu0 %v305, 100
  %v307 = vpop.permute.xlu0 %306
  %vm308 = vcmask 31744
  %s309 = scalar_lea.vmem %s1, 170
  %310 = vst.msk [vmem:[%s309] ss:$450 sm:$0x3] %vm308, %v307
  %s311 = scalar_lea.vmem %s1, 907
  %312 = vst.msk [vmem:[%s311] ss:$-287 sm:$0xc] %vm308, %v307
  %s313 = scalar_lea.vmem %s1, 1931
  %314 = vst.msk [vmem:[%s313] ss:$-287 sm:$0x70] %vm308, %v307
  %s315 = scalar_lea.vmem %s1, 652
  %316 = vst.msk [vmem:[%s315] sm:$0x80] %vm308, %v307
  %s317 = scalar_lea.vmem %s0, 2
  %v318 = vld.sshfl [vmem:[%s317] sm:$0xff pattern:$0x44444b07]
  %319 = vrot.lane.b32.xlu0 %v318, 100
  %v320 = vpop.permute.xlu0 %319
  %vm321 = vcmask 31744
  %s322 = scalar_lea.vmem %s1, 372
  %323 = vst.msk [vmem:[%s322] ss:$-287 sm:$0x3] %vm321, %v320
  %s324 = scalar_lea.vmem %s1, 1109
  %325 = vst.msk [vmem:[%s324] ss:$-287 sm:$0xc] %vm321, %v320
  %s326 = scalar_lea.vmem %s0, 3
  %v327 = vld.sshfl [vmem:[%s326] sm:$0xff pattern:$0x444b07e3]
  %s328 = scalar_lea.vmem %s0, 4294967188
  %s329 = smov 192
  %v330 = vld [vmem:[%s328] ss:$18 sm:%s329]
  %vm331 = vcmask 1047558
  %v332 = vsel %vm331, %v330, %v327
  %333 = vrot.lane.b32.xlu0 %v332, 96
  %v334 = vpop.permute.xlu0 %333
  %vm335 = vcmask 31744
  %s336 = scalar_lea.vmem %s1, 256
  %337 = vst.msk [vmem:[%s336] ss:$450 sm:$0x3] %vm335, %v334
  %s338 = scalar_lea.vmem %s1, 993
  %339 = vst.msk [vmem:[%s338] ss:$-287 sm:$0xc] %vm335, %v334
  %s340 = scalar_lea.vmem %s1, 1730
  %341 = vst.msk [vmem:[%s340] ss:$-287 sm:$0x70] %vm335, %v334
  %s342 = scalar_lea.vmem %s1, 738
  %343 = vst.msk [vmem:[%s342] sm:$0x80] %vm335, %v334
  %s344 = scalar_lea.vmem %s0, 1
  %v345 = vld.sshfl [vmem:[%s344] sm:$0xff pattern:$0x7e3a]
  %s346 = scalar_lea.vmem %s0, 54
  %v347 = vld [vmem:[%s346] ss:$-7 sm:$0xe0]
  %vm348 = vcmask 1047557
  %v349 = vsel %vm348, %v347, %v345
  %350 = vrot.lane.b32.xlu0 %v349, 96
  %v351 = vpop.permute.xlu0 %350
  %vm352 = vcmask 31744
  %s353 = scalar_lea.vmem %s1, 458
  %354 = vst.msk [vmem:[%s353] ss:$-287 sm:$0x3] %vm352, %v351
  %s355 = scalar_lea.vmem %s1, 1195
  %356 = vst.msk [vmem:[%s355] ss:$-287 sm:$0x1c] %vm352, %v351
  %s357 = scalar_lea.vmem %s1, 2219
  %358 = vst.msk [vmem:[%s357] ss:$-287 sm:$0xe0] %vm352, %v351
  %s359 = scalar_lea.vmem %s0, 2
  %v360 = vld.sshfl [vmem:[%s359] sm:$0xff pattern:$0xbbbbb07e]
  %361 = vrot.lane.b32.xlu0 %v360, 96
  %v362 = vpop.permute.xlu0 %361
  %vm363 = vcmask 31744
  %s364 = scalar_lea.vmem %s1, 660
  %365 = vst.msk [vmem:[%s364] ss:$-287 sm:$0x7] %vm363, %v362
  %s366 = scalar_lea.vmem %s1, 533
  %367 = vst.msk [vmem:[%s366] sm:$0x8] %vm363, %v362
  %s368 = scalar_lea.vmem %s0, 3
  %v369 = vld.sshfl [vmem:[%s368] sm:$0xff pattern:$0x44b07e3a]
  %s370 = scalar_lea.vmem %s0, 4294967289
  %v371 = vld [vmem:[%s370] sm:$0x80]
  %vm372 = vcmask 1047559
  %v373 = vsel %vm372, %v371, %v369
  %374 = vrot.lane.b32.xlu0 %v373, 92
  %v375 = vpop.permute.xlu0 %374
  %vm376 = vcmask 31744
  %s377 = scalar_lea.vmem %s1, 544
  %378 = vst.msk [vmem:[%s377] ss:$-287 sm:$0x3] %vm376, %v375
  %s379 = scalar_lea.vmem %s1, 1281
  %380 = vst.msk [vmem:[%s379] ss:$-287 sm:$0x1c] %vm376, %v375
  %s381 = scalar_lea.vmem %s1, 2018
  %382 = vst.msk [vmem:[%s381] ss:$-287 sm:$0xe0] %vm376, %v375
  %s383 = scalar_lea.vmem %s0, 4
  %v384 = vld.sshfl [vmem:[%s383] sm:$0xff pattern:$0x4444b07e]
  %s385 = scalar_lea.vmem %s0, 4294967207
  %s386 = smov 96
  %v387 = vld [vmem:[%s385] ss:$18 sm:%s386]
  %vm388 = vcmask 1046533
  %v389 = vsel %vm388, %v387, %v384
  %s390 = scalar_lea.vmem %s0, 5
  %v391 = vld [vmem:[%s390] sm:$0x80]
  %vm392 = vcmask 1047559
  %v393 = vsel %vm392, %v391, %v389
  %394 = vrot.lane.b32.xlu0 %v393, 92
  %v395 = vpop.permute.xlu0 %394
  %vm396 = vcmask 31744
  %s397 = scalar_lea.vmem %s1, 746
  %398 = vst.msk [vmem:[%s397] ss:$-287 sm:$0x7] %vm396, %v395
  %s399 = scalar_lea.vmem %s1, 1483
  %400 = vst.msk [vmem:[%s399] ss:$-287 sm:$0x38] %vm396, %v395
  %s401 = scalar_lea.vmem %s1, 2507
  %402 = vst.msk [vmem:[%s401] ss:$-287 sm:$0xc0] %vm396, %v395
  %s403 = scalar_lea.vmem %s0, 2
  %v404 = vld.sshfl [vmem:[%s403] sm:$0xff pattern:$0x7e3]
  %405 = vrot.lane.b32.xlu0 %v404, 92
  %v406 = vpop.permute.xlu0 %405
  %vm407 = vcmask 31744
  %s408 = scalar_lea.vmem %s1, 211
  %409 = vst.msk [vmem:[%s408] ss:$450 sm:$0x3] %vm407, %v406
  %s410 = scalar_lea.vmem %s1, 948
  %411 = vst.msk [vmem:[%s410] ss:$-287 sm:$0xc] %vm407, %v406
  %s412 = scalar_lea.vmem %s0, 3
  %v413 = vld.sshfl [vmem:[%s412] sm:$0xff pattern:$0x44b07e3a]
  %s414 = scalar_lea.vmem %s0, 4294967289
  %v415 = vld [vmem:[%s414] sm:$0x80]
  %vm416 = vcmask 1047559
  %v417 = vsel %vm416, %v415, %v413
  %418 = vrot.lane.b32.xlu0 %v417, 88
  %v419 = vpop.permute.xlu0 %418
  %vm420 = vcmask 31744
  %s421 = scalar_lea.vmem %s1, 545
  %422 = vst.msk [vmem:[%s421] ss:$-287 sm:$0x3] %vm420, %v419
  %s423 = scalar_lea.vmem %s1, 1282
  %424 = vst.msk [vmem:[%s423] ss:$-287 sm:$0x1c] %vm420, %v419
  %s425 = scalar_lea.vmem %s1, 2019
  %426 = vst.msk [vmem:[%s425] ss:$-287 sm:$0xe0] %vm420, %v419
  %s427 = scalar_lea.vmem %s0, 4
  %v428 = vld.sshfl [vmem:[%s427] sm:$0xff pattern:$0x4444b07e]
  %s429 = scalar_lea.vmem %s0, 4294967207
  %s430 = smov 96
  %v431 = vld [vmem:[%s429] ss:$18 sm:%s430]
  %vm432 = vcmask 1046533
  %v433 = vsel %vm432, %v431, %v428
  %s434 = scalar_lea.vmem %s0, 5
  %v435 = vld [vmem:[%s434] sm:$0x80]
  %vm436 = vcmask 1047559
  %v437 = vsel %vm436, %v435, %v433
  %438 = vrot.lane.b32.xlu0 %v437, 88
  %v439 = vpop.permute.xlu0 %438
  %vm440 = vcmask 31744
  %s441 = scalar_lea.vmem %s1, 747
  %442 = vst.msk [vmem:[%s441] ss:$-287 sm:$0x7] %vm440, %v439
  %s443 = scalar_lea.vmem %s1, 1484
  %444 = vst.msk [vmem:[%s443] ss:$-287 sm:$0x38] %vm440, %v439
  %s445 = scalar_lea.vmem %s1, 2508
  %446 = vst.msk [vmem:[%s445] ss:$-287 sm:$0xc0] %vm440, %v439
  %s447 = scalar_lea.vmem %s0, 2
  %v448 = vld.sshfl [vmem:[%s447] sm:$0xff pattern:$0x7e3]
  %449 = vrot.lane.b32.xlu0 %v448, 88
  %v450 = vpop.permute.xlu0 %449
  %vm451 = vcmask 31744
  %s452 = scalar_lea.vmem %s1, 212
  %453 = vst.msk [vmem:[%s452] ss:$450 sm:$0x3] %vm451, %v450
  %s454 = scalar_lea.vmem %s1, 949
  %455 = vst.msk [vmem:[%s454] ss:$-287 sm:$0xc] %vm451, %v450
  %s456 = scalar_lea.vmem %s0, 2
  %v457 = vld.sshfl [vmem:[%s456] sm:$0xff pattern:$0x5c18f4b0]
  %458 = vrot.lane.b32.xlu0 %v457, 84
  %v459 = vpop.permute.xlu0 %458
  %vm460 = vcmask 31744
  %s461 = scalar_lea.vmem %s1, 96
  %462 = vst.msk [vmem:[%s461] ss:$450 sm:$0x3] %vm460, %v459
  %s463 = scalar_lea.vmem %s1, 4294966655
  %464 = vst.msk [vmem:[%s463] ss:$450 sm:$0xc] %vm460, %v459
  %s465 = scalar_lea.vmem %s1, 1570
  %466 = vst.msk [vmem:[%s465] ss:$-287 sm:$0x30] %vm460, %v459
  %s467 = scalar_lea.vmem %s1, 2307
  %468 = vst.msk [vmem:[%s467] ss:$-287 sm:$0xc0] %vm460, %v459
  %s469 = smov 3
  %v470 = vld [vmem:[%s0] ss:$18 sm:%s469]
  %s471 = scalar_lea.vmem %s0, 1
  %v472 = vld.sshfl [vmem:[%s471] sm:$0xff pattern:$0x7e3aaa]
  %vm473 = vcmask 1046530
  %v474 = vsel %vm473, %v472, %v470
  %s475 = scalar_lea.vmem %s0, 12
  %v476 = vld [vmem:[%s475] sm:$0x80]
  %vm477 = vcmask 1047559
  %v478 = vsel %vm477, %v476, %v474
  %479 = vrot.lane.b32.xlu0 %v478, 84
  %v480 = vpop.permute.xlu0 %479
  %vm481 = vcmask 31744
  %s482 = scalar_lea.vmem %s1, 11
  %483 = vst.msk [vmem:[%s482] ss:$737 sm:$0x3] %vm481, %v480
  %s484 = scalar_lea.vmem %s1, 1035
  %485 = vst.msk [vmem:[%s484] ss:$-287 sm:$0xc] %vm481, %v480
  %s486 = scalar_lea.vmem %s1, 1772
  %487 = vst.msk [vmem:[%s486] ss:$-287 sm:$0x70] %vm481, %v480
  %s488 = scalar_lea.vmem %s1, 780
  %489 = vst.msk [vmem:[%s488] sm:$0x80] %vm481, %v480
  %s490 = scalar_lea.vmem %s0, 5
  %v491 = vld.sshfl [vmem:[%s490] sm:$0xff pattern:$0x44444b07]
  %492 = vrot.lane.b32.xlu0 %v491, 84
  %v493 = vpop.permute.xlu0 %492
  %vm494 = vcmask 31744
  %s495 = scalar_lea.vmem %s1, 500
  %496 = vst.msk [vmem:[%s495] ss:$-287 sm:$0x3] %vm494, %v493
  %s497 = scalar_lea.vmem %s1, 1237
  %498 = vst.msk [vmem:[%s497] ss:$-287 sm:$0xc] %vm494, %v493
  %s499 = scalar_lea.vmem %s0, 2
  %v500 = vld.sshfl [vmem:[%s499] sm:$0xff pattern:$0xc18f4b07]
  %501 = vrot.lane.b32.xlu0 %v500, 80
  %v502 = vpop.permute.xlu0 %501
  %vm503 = vcmask 31744
  %s504 = scalar_lea.vmem %s1, 384
  %505 = vst.msk [vmem:[%s504] ss:$-287 sm:$0x3] %vm503, %v502
  %s506 = scalar_lea.vmem %s1, 1121
  %507 = vst.msk [vmem:[%s506] ss:$-287 sm:$0xc] %vm503, %v502
  %s508 = scalar_lea.vmem %s1, 1858
  %509 = vst.msk [vmem:[%s508] ss:$-287 sm:$0x70] %vm503, %v502
  %s510 = scalar_lea.vmem %s1, 579
  %511 = vst.msk [vmem:[%s510] sm:$0x80] %vm503, %v502
  %s512 = scalar_lea.vmem %s0, 7
  %s513 = smov 3
  %v514 = vld [vmem:[%s512] ss:$-7 sm:%s513]
  %s515 = scalar_lea.vmem %s0, 4
  %v516 = vld.sshfl [vmem:[%s515] sm:$0xff pattern:$0x44b07eee]
  %vm517 = vcmask 1046530
  %v518 = vsel %vm517, %v516, %v514
  %s519 = scalar_lea.vmem %s0, 4294967290
  %v520 = vld [vmem:[%s519] sm:$0x80]
  %vm521 = vcmask 1047559
  %v522 = vsel %vm521, %v520, %v518
  %523 = vrot.lane.b32.xlu0 %v522, 80
  %v524 = vpop.permute.xlu0 %523
  %vm525 = vcmask 31744
  %s526 = scalar_lea.vmem %s1, 299
  %527 = vst.msk [vmem:[%s526] ss:$-287 sm:$0x3] %vm525, %v524
  %s528 = scalar_lea.vmem %s1, 1323
  %529 = vst.msk [vmem:[%s528] ss:$-287 sm:$0x1c] %vm525, %v524
  %s530 = scalar_lea.vmem %s1, 2060
  %531 = vst.msk [vmem:[%s530] ss:$-287 sm:$0xe0] %vm525, %v524
  %s532 = scalar_lea.vmem %s0, 5
  %v533 = vld.sshfl [vmem:[%s532] sm:$0xff pattern:$0xbbbbb07e]
  %534 = vrot.lane.b32.xlu0 %v533, 80
  %v535 = vpop.permute.xlu0 %534
  %vm536 = vcmask 31744
  %s537 = scalar_lea.vmem %s1, 788
  %538 = vst.msk [vmem:[%s537] ss:$-287 sm:$0x7] %vm536, %v535
  %s539 = scalar_lea.vmem %s1, 661
  %540 = vst.msk [vmem:[%s539] sm:$0x8] %vm536, %v535
  %s541 = scalar_lea.vmem %s0, 2
  %v542 = vld.sshfl [vmem:[%s541] sm:$0xff pattern:$0x18f4b07e]
  %543 = vrot.lane.b32.xlu0 %v542, 76
  %v544 = vpop.permute.xlu0 %543
  %vm545 = vcmask 31744
  %s546 = scalar_lea.vmem %s1, 672
  %547 = vst.msk [vmem:[%s546] ss:$-287 sm:$0x7] %vm545, %v544
  %s548 = scalar_lea.vmem %s1, 1409
  %549 = vst.msk [vmem:[%s548] ss:$-287 sm:$0x18] %vm545, %v544
  %s550 = scalar_lea.vmem %s1, 2146
  %551 = vst.msk [vmem:[%s550] ss:$-287 sm:$0xe0] %vm545, %v544
  %s552 = scalar_lea.vmem %s0, 14
  %v553 = vld [vmem:[%s552] ss:$-7 sm:$0x7]
  %s554 = scalar_lea.vmem %s0, 4
  %v555 = vld.sshfl [vmem:[%s554] sm:$0xff pattern:$0x4b07eeee]
  %vm556 = vcmask 1047555
  %v557 = vsel %vm556, %v555, %v553
  %558 = vrot.lane.b32.xlu0 %v557, 76
  %v559 = vpop.permute.xlu0 %558
  %vm560 = vcmask 31744
  %s561 = scalar_lea.vmem %s1, 587
  %562 = vst.msk [vmem:[%s561] ss:$-287 sm:$0x7] %vm560, %v559
  %s563 = scalar_lea.vmem %s1, 1611
  %564 = vst.msk [vmem:[%s563] ss:$-287 sm:$0x38] %vm560, %v559
  %s565 = scalar_lea.vmem %s1, 2348
  %566 = vst.msk [vmem:[%s565] ss:$-287 sm:$0xc0] %vm560, %v559
  %s567 = scalar_lea.vmem %s0, 1
  %s568 = smov 3
  %v569 = vld [vmem:[%s567] ss:$18 sm:%s568]
  %s570 = scalar_lea.vmem %s0, 26
  %s571 = smov 12
  %v572 = vld [vmem:[%s570] ss:$-7 sm:%s571]
  %vm573 = vcmask 1043458
  %v574 = vsel %vm573, %v572, %v569
  %575 = vrot.lane.b32.xlu0 %v574, 76
  %v576 = vpop.permute.xlu0 %575
  %vm577 = vcmask 31744
  %s578 = scalar_lea.vmem %s1, 52
  %579 = vst.msk [vmem:[%s578] ss:$737 sm:$0x3] %vm577, %v576
  %s580 = scalar_lea.vmem %s1, 1076
  %581 = vst.msk [vmem:[%s580] ss:$-287 sm:$0xc] %vm577, %v576
  %s582 = scalar_lea.vmem %s0, 2
  %v583 = vld.sshfl [vmem:[%s582] sm:$0xff pattern:$0x18f4b07e]
  %584 = vrot.lane.b32.xlu0 %v583, 72
  %v585 = vpop.permute.xlu0 %584
  %vm586 = vcmask 31744
  %s587 = scalar_lea.vmem %s1, 673
  %588 = vst.msk [vmem:[%s587] ss:$-287 sm:$0x7] %vm586, %v585
  %s589 = scalar_lea.vmem %s1, 1410
  %590 = vst.msk [vmem:[%s589] ss:$-287 sm:$0x18] %vm586, %v585
  %s591 = scalar_lea.vmem %s1, 2147
  %592 = vst.msk [vmem:[%s591] ss:$-287 sm:$0xe0] %vm586, %v585
  %s593 = scalar_lea.vmem %s0, 14
  %v594 = vld [vmem:[%s593] ss:$-7 sm:$0x7]
  %s595 = scalar_lea.vmem %s0, 4
  %v596 = vld.sshfl [vmem:[%s595] sm:$0xff pattern:$0x4b07eeee]
  %vm597 = vcmask 1047555
  %v598 = vsel %vm597, %v596, %v594
  %599 = vrot.lane.b32.xlu0 %v598, 72
  %v600 = vpop.permute.xlu0 %599
  %vm601 = vcmask 31744
  %s602 = scalar_lea.vmem %s1, 588
  %603 = vst.msk [vmem:[%s602] ss:$-287 sm:$0x7] %vm601, %v600
  %s604 = scalar_lea.vmem %s1, 1612
  %605 = vst.msk [vmem:[%s604] ss:$-287 sm:$0x38] %vm601, %v600
  %s606 = scalar_lea.vmem %s1, 2349
  %607 = vst.msk [vmem:[%s606] ss:$-287 sm:$0xc0] %vm601, %v600
  %s608 = scalar_lea.vmem %s0, 1
  %s609 = smov 3
  %v610 = vld [vmem:[%s608] ss:$18 sm:%s609]
  %s611 = scalar_lea.vmem %s0, 26
  %s612 = smov 12
  %v613 = vld [vmem:[%s611] ss:$-7 sm:%s612]
  %vm614 = vcmask 1043458
  %v615 = vsel %vm614, %v613, %v610
  %616 = vrot.lane.b32.xlu0 %v615, 72
  %v617 = vpop.permute.xlu0 %616
  %vm618 = vcmask 31744
  %s619 = scalar_lea.vmem %s1, 53
  %620 = vst.msk [vmem:[%s619] ss:$737 sm:$0x3] %vm618, %v617
  %s621 = scalar_lea.vmem %s1, 1077
  %622 = vst.msk [vmem:[%s621] ss:$-287 sm:$0xc] %vm618, %v617
  %s623 = scalar_lea.vmem %s0, 2
  %v624 = vld.sshfl [vmem:[%s623] sm:$0xff pattern:$0x8f4b07e3]
  %625 = vrot.lane.b32.xlu0 %v624, 68
  %v626 = vpop.permute.xlu0 %625
  %vm627 = vcmask 31744
  %s628 = scalar_lea.vmem %s1, 224
  %629 = vst.msk [vmem:[%s628] ss:$450 sm:$0x3] %vm627, %v626
  %s630 = scalar_lea.vmem %s1, 961
  %631 = vst.msk [vmem:[%s630] ss:$-287 sm:$0xc] %vm627, %v626
  %s632 = scalar_lea.vmem %s1, 1698
  %633 = vst.msk [vmem:[%s632] ss:$-287 sm:$0x30] %vm627, %v626
  %s634 = scalar_lea.vmem %s1, 2435
  %635 = vst.msk [vmem:[%s634] ss:$-287 sm:$0xc0] %vm627, %v626
  %v636 = vld.sshfl [vmem:[%s0] sm:$0xff pattern:$0x7e3]
  %s637 = scalar_lea.vmem %s0, 4
  %v638 = vld.sshfl [vmem:[%s637] sm:$0xff pattern:$0xb07eeeee]
  %vm639 = vcmask 1047556
  %v640 = vsel %vm639, %v638, %v636
  %641 = vrot.lane.b32.xlu0 %v640, 68
  %v642 = vpop.permute.xlu0 %641
  %vm643 = vcmask 31744
  %s644 = scalar_lea.vmem %s1, 139
  %645 = vst.msk [vmem:[%s644] ss:$450 sm:$0x3] %vm643, %v642
  %s646 = scalar_lea.vmem %s1, 876
  %647 = vst.msk [vmem:[%s646] ss:$-287 sm:$0xc] %vm643, %v642
  %s648 = scalar_lea.vmem %s1, 1900
  %649 = vst.msk [vmem:[%s648] ss:$-287 sm:$0x70] %vm643, %v642
  %s650 = scalar_lea.vmem %s1, 621
  %651 = vst.msk [vmem:[%s650] sm:$0x80] %vm643, %v642
  %s652 = scalar_lea.vmem %s0, 8
  %s653 = smov 3
  %v654 = vld [vmem:[%s652] ss:$-7 sm:%s653]
  %s655 = scalar_lea.vmem %s0, 33
  %s656 = smov 12
  %v657 = vld [vmem:[%s655] ss:$-7 sm:%s656]
  %vm658 = vcmask 1043458
  %v659 = vsel %vm658, %v657, %v654
  %660 = vrot.lane.b32.xlu0 %v659, 68
  %v661 = vpop.permute.xlu0 %660
  %vm662 = vcmask 31744
  %s663 = scalar_lea.vmem %s1, 341
  %664 = vst.msk [vmem:[%s663] ss:$-287 sm:$0x3] %vm662, %v661
  %s665 = scalar_lea.vmem %s1, 1365
  %666 = vst.msk [vmem:[%s665] ss:$-287 sm:$0xc] %vm662, %v661
  %s667 = scalar_lea.vmem %s0, 2
  %v668 = vld.sshfl [vmem:[%s667] sm:$0xff pattern:$0xf4b07e3a]
  %669 = vrot.lane.b32.xlu0 %v668, 64
  %v670 = vpop.permute.xlu0 %669
  %vm671 = vcmask 31744
  %s672 = scalar_lea.vmem %s1, 512
  %673 = vst.msk [vmem:[%s672] ss:$-287 sm:$0x3] %vm671, %v670
  %s674 = scalar_lea.vmem %s1, 1249
  %675 = vst.msk [vmem:[%s674] ss:$-287 sm:$0x1c] %vm671, %v670
  %s676 = scalar_lea.vmem %s1, 1986
  %677 = vst.msk [vmem:[%s676] ss:$-287 sm:$0x60] %vm671, %v670
  %s678 = scalar_lea.vmem %s1, 707
  %679 = vst.msk [vmem:[%s678] sm:$0x80] %vm671, %v670
  %v680 = vld.sshfl [vmem:[%s0] sm:$0xff pattern:$0x7e3a]
  %s681 = scalar_lea.vmem %s0, 53
  %v682 = vld [vmem:[%s681] ss:$-7 sm:$0xe0]
  %vm683 = vcmask 1047557
  %v684 = vsel %vm683, %v682, %v680
  %685 = vrot.lane.b32.xlu0 %v684, 64
  %v686 = vpop.permute.xlu0 %685
  %vm687 = vcmask 31744
  %s688 = scalar_lea.vmem %s1, 427
  %689 = vst.msk [vmem:[%s688] ss:$-287 sm:$0x3] %vm687, %v686
  %s690 = scalar_lea.vmem %s1, 1164
  %691 = vst.msk [vmem:[%s690] ss:$-287 sm:$0x1c] %vm687, %v686
  %s692 = scalar_lea.vmem %s1, 2188
  %693 = vst.msk [vmem:[%s692] ss:$-287 sm:$0xe0] %vm687, %v686
  %s694 = scalar_lea.vmem %s0, 15
  %v695 = vld [vmem:[%s694] ss:$-7 sm:$0x7]
  %s696 = scalar_lea.vmem %s0, 16
  %v697 = vld [vmem:[%s696] sm:$0x8]
  %vm698 = vcmask 1043459
  %v699 = vsel %vm698, %v697, %v695
  %700 = vrot.lane.b32.xlu0 %v699, 64
  %v701 = vpop.permute.xlu0 %700
  %vm702 = vcmask 31744
  %s703 = scalar_lea.vmem %s1, 629
  %704 = vst.msk [vmem:[%s703] ss:$-287 sm:$0x7] %vm702, %v701
  %s705 = scalar_lea.vmem %s1, 789
  %706 = vst.msk [vmem:[%s705] sm:$0x8] %vm702, %v701
  %s707 = scalar_lea.vmem %s0, 2
  %v708 = vld.sshfl [vmem:[%s707] sm:$0xff pattern:$0xf4b07e3a]
  %709 = vrot.lane.b32.xlu0 %v708, 60
  %v710 = vpop.permute.xlu0 %709
  %vm711 = vcmask 31744
  %s712 = scalar_lea.vmem %s1, 513
  %713 = vst.msk [vmem:[%s712] ss:$-287 sm:$0x3] %vm711, %v710
  %s714 = scalar_lea.vmem %s1, 1250
  %715 = vst.msk [vmem:[%s714] ss:$-287 sm:$0x1c] %vm711, %v710
  %s716 = scalar_lea.vmem %s1, 1987
  %717 = vst.msk [vmem:[%s716] ss:$-287 sm:$0x60] %vm711, %v710
  %s718 = scalar_lea.vmem %s1, 708
  %719 = vst.msk [vmem:[%s718] sm:$0x80] %vm711, %v710
  %v720 = vld.sshfl [vmem:[%s0] sm:$0xff pattern:$0x7e3a]
  %s721 = scalar_lea.vmem %s0, 53
  %v722 = vld [vmem:[%s721] ss:$-7 sm:$0xe0]
  %vm723 = vcmask 1047557
  %v724 = vsel %vm723, %v722, %v720
  %725 = vrot.lane.b32.xlu0 %v724, 60
  %v726 = vpop.permute.xlu0 %725
  %vm727 = vcmask 31744
  %s728 = scalar_lea.vmem %s1, 428
  %729 = vst.msk [vmem:[%s728] ss:$-287 sm:$0x3] %vm727, %v726
  %s730 = scalar_lea.vmem %s1, 1165
  %731 = vst.msk [vmem:[%s730] ss:$-287 sm:$0x1c] %vm727, %v726
  %s732 = scalar_lea.vmem %s1, 2189
  %733 = vst.msk [vmem:[%s732] ss:$-287 sm:$0xe0] %vm727, %v726
  %s734 = scalar_lea.vmem %s0, 15
  %v735 = vld [vmem:[%s734] ss:$-7 sm:$0x7]
  %736 = vrot.lane.b32.xlu0 %v735, 60
  %v737 = vpop.permute.xlu0 %736
  %vm738 = vcmask 31744
  %s739 = scalar_lea.vmem %s1, 630
  %740 = vst.msk [vmem:[%s739] ss:$-287 sm:$0x7] %vm738, %v737
  %s741 = scalar_lea.vmem %s0, 1
  %v742 = vld.sshfl [vmem:[%s741] sm:$0xff pattern:$0x5c18f4b0]
  %743 = vrot.lane.b32.xlu0 %v742, 56
  %v744 = vpop.permute.xlu0 %743
  %vm745 = vcmask 31744
  %s746 = scalar_lea.vmem %s1, 64
  %747 = vst.msk [vmem:[%s746] ss:$450 sm:$0x3] %vm745, %v744
  %s748 = scalar_lea.vmem %s1, 4294966623
  %749 = vst.msk [vmem:[%s748] ss:$450 sm:$0xc] %vm745, %v744
  %s750 = scalar_lea.vmem %s1, 1538
  %751 = vst.msk [vmem:[%s750] ss:$-287 sm:$0x30] %vm745, %v744
  %s752 = scalar_lea.vmem %s1, 2275
  %753 = vst.msk [vmem:[%s752] ss:$-287 sm:$0xc0] %vm745, %v744
  %s754 = scalar_lea.vmem %s0, 3
  %v755 = vld.sshfl [vmem:[%s754] sm:$0xff pattern:$0x4444b07e]
  %s756 = scalar_lea.vmem %s0, 4294967206
  %s757 = smov 96
  %v758 = vld [vmem:[%s756] ss:$18 sm:%s757]
  %vm759 = vcmask 1046533
  %v760 = vsel %vm759, %v758, %v755
  %s761 = scalar_lea.vmem %s0, 4
  %v762 = vld [vmem:[%s761] sm:$0x80]
  %vm763 = vcmask 1047559
  %v764 = vsel %vm763, %v762, %v760
  %765 = vrot.lane.b32.xlu0 %v764, 56
  %v766 = vpop.permute.xlu0 %765
  %vm767 = vcmask 31744
  %s768 = scalar_lea.vmem %s1, 716
  %769 = vst.msk [vmem:[%s768] ss:$-287 sm:$0x7] %vm767, %v766
  %s770 = scalar_lea.vmem %s1, 1453
  %771 = vst.msk [vmem:[%s770] ss:$-287 sm:$0x38] %vm767, %v766
  %s772 = scalar_lea.vmem %s1, 2477
  %773 = vst.msk [vmem:[%s772] ss:$-287 sm:$0xc0] %vm767, %v766
  %s774 = scalar_lea.vmem %s0, 4
  %v775 = vld.sshfl [vmem:[%s774] sm:$0xff pattern:$0x444444b0]
  %776 = vrot.lane.b32.xlu0 %v775, 56
  %v777 = vpop.permute.xlu0 %776
  %vm778 = vcmask 31744
  %s779 = scalar_lea.vmem %s1, 181
  %780 = vst.msk [vmem:[%s779] ss:$450 sm:$0x3] %vm778, %v777
  %s781 = scalar_lea.vmem %s1, 342
  %782 = vst.msk [vmem:[%s781] sm:$0x4] %vm778, %v777
  %s783 = scalar_lea.vmem %s0, 1
  %v784 = vld.sshfl [vmem:[%s783] sm:$0xff pattern:$0xc18f4b07]
  %785 = vrot.lane.b32.xlu0 %v784, 52
  %v786 = vpop.permute.xlu0 %785
  %vm787 = vcmask 31744
  %s788 = scalar_lea.vmem %s1, 352
  %789 = vst.msk [vmem:[%s788] ss:$-287 sm:$0x3] %vm787, %v786
  %s790 = scalar_lea.vmem %s1, 1089
  %791 = vst.msk [vmem:[%s790] ss:$-287 sm:$0xc] %vm787, %v786
  %s792 = scalar_lea.vmem %s1, 1826
  %793 = vst.msk [vmem:[%s792] ss:$-287 sm:$0x70] %vm787, %v786
  %s794 = scalar_lea.vmem %s1, 547
  %795 = vst.msk [vmem:[%s794] sm:$0x80] %vm787, %v786
  %s796 = scalar_lea.vmem %s0, 3
  %v797 = vld.sshfl [vmem:[%s796] sm:$0xff pattern:$0x444b07e3]
  %s798 = scalar_lea.vmem %s0, 4294967188
  %s799 = smov 192
  %v800 = vld [vmem:[%s798] ss:$18 sm:%s799]
  %vm801 = vcmask 1047558
  %v802 = vsel %vm801, %v800, %v797
  %803 = vrot.lane.b32.xlu0 %v802, 52
  %v804 = vpop.permute.xlu0 %803
  %vm805 = vcmask 31744
  %s806 = scalar_lea.vmem %s1, 267
  %807 = vst.msk [vmem:[%s806] ss:$450 sm:$0x3] %vm805, %v804
  %s808 = scalar_lea.vmem %s1, 1004
  %809 = vst.msk [vmem:[%s808] ss:$-287 sm:$0xc] %vm805, %v804
  %s810 = scalar_lea.vmem %s1, 1741
  %811 = vst.msk [vmem:[%s810] ss:$-287 sm:$0x70] %vm805, %v804
  %s812 = scalar_lea.vmem %s1, 749
  %813 = vst.msk [vmem:[%s812] sm:$0x80] %vm805, %v804
  %s814 = scalar_lea.vmem %s0, 4
  %v815 = vld.sshfl [vmem:[%s814] sm:$0xff pattern:$0xbbbbbb07]
  %816 = vrot.lane.b32.xlu0 %v815, 52
  %v817 = vpop.permute.xlu0 %816
  %vm818 = vcmask 31744
  %s819 = scalar_lea.vmem %s1, 469
  %820 = vst.msk [vmem:[%s819] ss:$-287 sm:$0x3] %vm818, %v817
  %s821 = scalar_lea.vmem %s1, 630
  %822 = vst.msk [vmem:[%s821] sm:$0x4] %vm818, %v817
  %s823 = scalar_lea.vmem %s0, 1
  %v824 = vld.sshfl [vmem:[%s823] sm:$0xff pattern:$0x18f4b07e]
  %825 = vrot.lane.b32.xlu0 %v824, 48
  %v826 = vpop.permute.xlu0 %825
  %vm827 = vcmask 31744
  %s828 = scalar_lea.vmem %s1, 640
  %829 = vst.msk [vmem:[%s828] ss:$-287 sm:$0x7] %vm827, %v826
  %s830 = scalar_lea.vmem %s1, 1377
  %831 = vst.msk [vmem:[%s830] ss:$-287 sm:$0x18] %vm827, %v826
  %s832 = scalar_lea.vmem %s1, 2114
  %833 = vst.msk [vmem:[%s832] ss:$-287 sm:$0xe0] %vm827, %v826
  %s834 = scalar_lea.vmem %s0, 3
  %v835 = vld.sshfl [vmem:[%s834] sm:$0xff pattern:$0x44b07e3a]
  %s836 = scalar_lea.vmem %s0, 4294967289
  %v837 = vld [vmem:[%s836] sm:$0x80]
  %vm838 = vcmask 1047559
  %v839 = vsel %vm838, %v837, %v835
  %840 = vrot.lane.b32.xlu0 %v839, 48
  %v841 = vpop.permute.xlu0 %840
  %vm842 = vcmask 31744
  %s843 = scalar_lea.vmem %s1, 555
  %844 = vst.msk [vmem:[%s843] ss:$-287 sm:$0x3] %vm842, %v841
  %s845 = scalar_lea.vmem %s1, 1292
  %846 = vst.msk [vmem:[%s845] ss:$-287 sm:$0x1c] %vm842, %v841
  %s847 = scalar_lea.vmem %s1, 2029
  %848 = vst.msk [vmem:[%s847] ss:$-287 sm:$0xe0] %vm842, %v841
  %s849 = scalar_lea.vmem %s0, 18
  %v850 = vld [vmem:[%s849] ss:$-7 sm:$0x7]
  %851 = vrot.lane.b32.xlu0 %v850, 48
  %v852 = vpop.permute.xlu0 %851
  %vm853 = vcmask 31744
  %s854 = scalar_lea.vmem %s1, 757
  %855 = vst.msk [vmem:[%s854] ss:$-287 sm:$0x7] %vm853, %v852
  %s856 = scalar_lea.vmem %s0, 1
  %v857 = vld.sshfl [vmem:[%s856] sm:$0xff pattern:$0x18f4b07e]
  %858 = vrot.lane.b32.xlu0 %v857, 44
  %v859 = vpop.permute.xlu0 %858
  %vm860 = vcmask 31744
  %s861 = scalar_lea.vmem %s1, 641
  %862 = vst.msk [vmem:[%s861] ss:$-287 sm:$0x7] %vm860, %v859
  %s863 = scalar_lea.vmem %s1, 1378
  %864 = vst.msk [vmem:[%s863] ss:$-287 sm:$0x18] %vm860, %v859
  %s865 = scalar_lea.vmem %s1, 2115
  %866 = vst.msk [vmem:[%s865] ss:$-287 sm:$0xe0] %vm860, %v859
  %s867 = scalar_lea.vmem %s0, 3
  %v868 = vld.sshfl [vmem:[%s867] sm:$0xff pattern:$0x44b07e3a]
  %s869 = scalar_lea.vmem %s0, 4294967289
  %v870 = vld [vmem:[%s869] sm:$0x80]
  %vm871 = vcmask 1047559
  %v872 = vsel %vm871, %v870, %v868
  %873 = vrot.lane.b32.xlu0 %v872, 44
  %v874 = vpop.permute.xlu0 %873
  %vm875 = vcmask 31744
  %s876 = scalar_lea.vmem %s1, 556
  %877 = vst.msk [vmem:[%s876] ss:$-287 sm:$0x3] %vm875, %v874
  %s878 = scalar_lea.vmem %s1, 1293
  %879 = vst.msk [vmem:[%s878] ss:$-287 sm:$0x1c] %vm875, %v874
  %s880 = scalar_lea.vmem %s1, 2030
  %881 = vst.msk [vmem:[%s880] ss:$-287 sm:$0xe0] %vm875, %v874
  %s882 = scalar_lea.vmem %s0, 18
  %v883 = vld [vmem:[%s882] ss:$-7 sm:$0x7]
  %884 = vrot.lane.b32.xlu0 %v883, 44
  %v885 = vpop.permute.xlu0 %884
  %vm886 = vcmask 31744
  %s887 = scalar_lea.vmem %s1, 758
  %888 = vst.msk [vmem:[%s887] ss:$-287 sm:$0x7] %vm886, %v885
  %s889 = scalar_lea.vmem %s0, 1
  %v890 = vld.sshfl [vmem:[%s889] sm:$0xff pattern:$0x8f4b07e3]
  %891 = vrot.lane.b32.xlu0 %v890, 40
  %v892 = vpop.permute.xlu0 %891
  %vm893 = vcmask 31744
  %s894 = scalar_lea.vmem %s1, 192
  %895 = vst.msk [vmem:[%s894] ss:$450 sm:$0x3] %vm893, %v892
  %s896 = scalar_lea.vmem %s1, 929
  %897 = vst.msk [vmem:[%s896] ss:$-287 sm:$0xc] %vm893, %v892
  %s898 = scalar_lea.vmem %s1, 1666
  %899 = vst.msk [vmem:[%s898] ss:$-287 sm:$0x30] %vm893, %v892
  %s900 = scalar_lea.vmem %s1, 2403
  %901 = vst.msk [vmem:[%s900] ss:$-287 sm:$0xc0] %vm893, %v892
  %s902 = scalar_lea.vmem %s0, 2
  %v903 = vld.sshfl [vmem:[%s902] sm:$0xff pattern:$0x5c18f4b0]
  %904 = vrot.lane.b32.xlu0 %v903, 40
  %v905 = vpop.permute.xlu0 %904
  %vm906 = vcmask 31744
  %s907 = scalar_lea.vmem %s1, 107
  %908 = vst.msk [vmem:[%s907] ss:$450 sm:$0x3] %vm906, %v905
  %s909 = scalar_lea.vmem %s1, 4294966666
  %910 = vst.msk [vmem:[%s909] ss:$450 sm:$0xc] %vm906, %v905
  %s911 = scalar_lea.vmem %s1, 1581
  %912 = vst.msk [vmem:[%s911] ss:$-287 sm:$0x30] %vm906, %v905
  %s913 = scalar_lea.vmem %s1, 2318
  %914 = vst.msk [vmem:[%s913] ss:$-287 sm:$0xc0] %vm906, %v905
  %s915 = smov 3
  %v916 = vld [vmem:[%s0] ss:$18 sm:%s915]
  %s917 = scalar_lea.vmem %s0, 9
  %v918 = vld [vmem:[%s917] sm:$0x4]
  %vm919 = vcmask 1042434
  %v920 = vsel %vm919, %v918, %v916
  %921 = vrot.lane.b32.xlu0 %v920, 40
  %v922 = vpop.permute.xlu0 %921
  %vm923 = vcmask 31744
  %s924 = scalar_lea.vmem %s1, 22
  %925 = vst.msk [vmem:[%s924] ss:$737 sm:$0x3] %vm923, %v922
  %s926 = scalar_lea.vmem %s1, 470
  %927 = vst.msk [vmem:[%s926] sm:$0x4] %vm923, %v922
  %s928 = scalar_lea.vmem %s0, 1
  %v929 = vld.sshfl [vmem:[%s928] sm:$0xff pattern:$0xf4b07e3a]
  %930 = vrot.lane.b32.xlu0 %v929, 36
  %v931 = vpop.permute.xlu0 %930
  %vm932 = vcmask 31744
  %s933 = scalar_lea.vmem %s1, 480
  %934 = vst.msk [vmem:[%s933] ss:$-287 sm:$0x3] %vm932, %v931
  %s935 = scalar_lea.vmem %s1, 1217
  %936 = vst.msk [vmem:[%s935] ss:$-287 sm:$0x1c] %vm932, %v931
  %s937 = scalar_lea.vmem %s1, 1954
  %938 = vst.msk [vmem:[%s937] ss:$-287 sm:$0x60] %vm932, %v931
  %s939 = scalar_lea.vmem %s1, 675
  %940 = vst.msk [vmem:[%s939] sm:$0x80] %vm932, %v931
  %s941 = scalar_lea.vmem %s0, 2
  %v942 = vld.sshfl [vmem:[%s941] sm:$0xff pattern:$0xc18f4b07]
  %943 = vrot.lane.b32.xlu0 %v942, 36
  %v944 = vpop.permute.xlu0 %943
  %vm945 = vcmask 31744
  %s946 = scalar_lea.vmem %s1, 395
  %947 = vst.msk [vmem:[%s946] ss:$-287 sm:$0x3] %vm945, %v944
  %s948 = scalar_lea.vmem %s1, 1132
  %949 = vst.msk [vmem:[%s948] ss:$-287 sm:$0xc] %vm945, %v944
  %s950 = scalar_lea.vmem %s1, 1869
  %951 = vst.msk [vmem:[%s950] ss:$-287 sm:$0x70] %vm945, %v944
  %s952 = scalar_lea.vmem %s1, 590
  %953 = vst.msk [vmem:[%s952] sm:$0x80] %vm945, %v944
  %s954 = scalar_lea.vmem %s0, 7
  %s955 = smov 3
  %v956 = vld [vmem:[%s954] ss:$-7 sm:%s955]
  %s957 = scalar_lea.vmem %s0, 16
  %v958 = vld [vmem:[%s957] sm:$0x4]
  %vm959 = vcmask 1042434
  %v960 = vsel %vm959, %v958, %v956
  %961 = vrot.lane.b32.xlu0 %v960, 36
  %v962 = vpop.permute.xlu0 %961
  %vm963 = vcmask 31744
  %s964 = scalar_lea.vmem %s1, 310
  %965 = vst.msk [vmem:[%s964] ss:$-287 sm:$0x3] %vm963, %v962
  %s966 = scalar_lea.vmem %s1, 758
  %967 = vst.msk [vmem:[%s966] sm:$0x4] %vm963, %v962
  %s968 = scalar_lea.vmem %s0, 4
  %v969 = vld.sshfl [vmem:[%s968] sm:$0xff pattern:$0x4444b07e]
  %s970 = scalar_lea.vmem %s0, 1
  %v971 = vld.sshfl [vmem:[%s970] sm:$0xff pattern:$0x4b000000]
  %vm972 = vcmask 1047557
  %v973 = vsel %vm972, %v971, %v969
  %974 = vrot.lane.b32.xlu0 %v973, 32
  %v975 = vpop.permute.xlu0 %974
  %vm976 = vcmask 31744
  %s977 = scalar_lea.vmem %s1, 768
  %978 = vst.msk [vmem:[%s977] ss:$-287 sm:$0x7] %vm976, %v975
  %s979 = scalar_lea.vmem %s1, 1505
  %980 = vst.msk [vmem:[%s979] ss:$-287 sm:$0x38] %vm976, %v975
  %s981 = scalar_lea.vmem %s1, 2242
  %982 = vst.msk [vmem:[%s981] ss:$-287 sm:$0xc0] %vm976, %v975
  %s983 = scalar_lea.vmem %s0, 2
  %v984 = vld.sshfl [vmem:[%s983] sm:$0xff pattern:$0x18f4b07e]
  %985 = vrot.lane.b32.xlu0 %v984, 32
  %v986 = vpop.permute.xlu0 %985
  %vm987 = vcmask 31744
  %s988 = scalar_lea.vmem %s1, 683
  %989 = vst.msk [vmem:[%s988] ss:$-287 sm:$0x7] %vm987, %v986
  %s990 = scalar_lea.vmem %s1, 1420
  %991 = vst.msk [vmem:[%s990] ss:$-287 sm:$0x18] %vm987, %v986
  %s992 = scalar_lea.vmem %s1, 2157
  %993 = vst.msk [vmem:[%s992] ss:$-287 sm:$0xe0] %vm987, %v986
  %s994 = scalar_lea.vmem %s0, 14
  %v995 = vld [vmem:[%s994] ss:$-7 sm:$0x7]
  %996 = vrot.lane.b32.xlu0 %v995, 32
  %v997 = vpop.permute.xlu0 %996
  %vm998 = vcmask 31744
  %s999 = scalar_lea.vmem %s1, 598
  %1000 = vst.msk [vmem:[%s999] ss:$-287 sm:$0x7] %vm998, %v997
  %s1001 = smov 3
  %v1002 = vld [vmem:[%s0] ss:$18 sm:%s1001]
  %s1003 = scalar_lea.vmem %s0, 1
  %v1004 = vld.sshfl [vmem:[%s1003] sm:$0xff pattern:$0xb07e3aaa]
  %vm1005 = vcmask 1047554
  %v1006 = vsel %vm1005, %v1004, %v1002
  %1007 = vrot.lane.b32.xlu0 %v1006, 28
  %v1008 = vpop.permute.xlu0 %1007
  %vm1009 = vcmask 31744
  %s1010 = scalar_lea.vmem %s1, 32
  %1011 = vst.msk [vmem:[%s1010] ss:$737 sm:$0x3] %vm1009, %v1008
  %s1012 = scalar_lea.vmem %s1, 1056
  %1013 = vst.msk [vmem:[%s1012] ss:$-287 sm:$0xc] %vm1009, %v1008
  %s1014 = scalar_lea.vmem %s1, 1793
  %1015 = vst.msk [vmem:[%s1014] ss:$-287 sm:$0x70] %vm1009, %v1008
  %s1016 = scalar_lea.vmem %s1, 514
  %1017 = vst.msk [vmem:[%s1016] sm:$0x80] %vm1009, %v1008
  %s1018 = scalar_lea.vmem %s0, 2
  %v1019 = vld.sshfl [vmem:[%s1018] sm:$0xff pattern:$0x8f4b07e3]
  %1020 = vrot.lane.b32.xlu0 %v1019, 28
  %v1021 = vpop.permute.xlu0 %1020
  %vm1022 = vcmask 31744
  %s1023 = scalar_lea.vmem %s1, 234
  %1024 = vst.msk [vmem:[%s1023] ss:$450 sm:$0x3] %vm1022, %v1021
  %s1025 = scalar_lea.vmem %s1, 971
  %1026 = vst.msk [vmem:[%s1025] ss:$-287 sm:$0xc] %vm1022, %v1021
  %s1027 = scalar_lea.vmem %s1, 1708
  %1028 = vst.msk [vmem:[%s1027] ss:$-287 sm:$0x30] %vm1022, %v1021
  %s1029 = scalar_lea.vmem %s1, 2445
  %1030 = vst.msk [vmem:[%s1029] ss:$-287 sm:$0xc0] %vm1022, %v1021
  %s1031 = scalar_lea.vmem %s0, 3
  %v1032 = vld.sshfl [vmem:[%s1031] sm:$0xff pattern:$0x444444b0]
  %1033 = vrot.lane.b32.xlu0 %v1032, 28
  %v1034 = vpop.permute.xlu0 %1033
  %vm1035 = vcmask 31744
  %s1036 = scalar_lea.vmem %s1, 149
  %1037 = vst.msk [vmem:[%s1036] ss:$450 sm:$0x3] %vm1035, %v1034
  %s1038 = scalar_lea.vmem %s1, 310
  %1039 = vst.msk [vmem:[%s1038] sm:$0x4] %vm1035, %v1034
  %s1040 = scalar_lea.vmem %s0, 7
  %s1041 = smov 3
  %v1042 = vld [vmem:[%s1040] ss:$-7 sm:%s1041]
  %s1043 = scalar_lea.vmem %s0, 4
  %v1044 = vld.sshfl [vmem:[%s1043] sm:$0xff pattern:$0x44b07eee]
  %vm1045 = vcmask 1046530
  %v1046 = vsel %vm1045, %v1044, %v1042
  %s1047 = scalar_lea.vmem %s0, 4294967290
  %v1048 = vld [vmem:[%s1047] sm:$0x80]
  %vm1049 = vcmask 1047559
  %v1050 = vsel %vm1049, %v1048, %v1046
  %1051 = vrot.lane.b32.xlu0 %v1050, 24
  %v1052 = vpop.permute.xlu0 %1051
  %vm1053 = vcmask 31744
  %s1054 = scalar_lea.vmem %s1, 320
  %1055 = vst.msk [vmem:[%s1054] ss:$-287 sm:$0x3] %vm1053, %v1052
  %s1056 = scalar_lea.vmem %s1, 1344
  %1057 = vst.msk [vmem:[%s1056] ss:$-287 sm:$0x1c] %vm1053, %v1052
  %s1058 = scalar_lea.vmem %s1, 2081
  %1059 = vst.msk [vmem:[%s1058] ss:$-287 sm:$0xe0] %vm1053, %v1052
  %s1060 = scalar_lea.vmem %s0, 2
  %v1061 = vld.sshfl [vmem:[%s1060] sm:$0xff pattern:$0xf4b07e3a]
  %1062 = vrot.lane.b32.xlu0 %v1061, 24
  %v1063 = vpop.permute.xlu0 %1062
  %vm1064 = vcmask 31744
  %s1065 = scalar_lea.vmem %s1, 522
  %1066 = vst.msk [vmem:[%s1065] ss:$-287 sm:$0x3] %vm1064, %v1063
  %s1067 = scalar_lea.vmem %s1, 1259
  %1068 = vst.msk [vmem:[%s1067] ss:$-287 sm:$0x1c] %vm1064, %v1063
  %s1069 = scalar_lea.vmem %s1, 1996
  %1070 = vst.msk [vmem:[%s1069] ss:$-287 sm:$0x60] %vm1064, %v1063
  %s1071 = scalar_lea.vmem %s1, 717
  %1072 = vst.msk [vmem:[%s1071] sm:$0x80] %vm1064, %v1063
  %s1073 = scalar_lea.vmem %s0, 3
  %v1074 = vld.sshfl [vmem:[%s1073] sm:$0xff pattern:$0xbbbbbb07]
  %1075 = vrot.lane.b32.xlu0 %v1074, 24
  %v1076 = vpop.permute.xlu0 %1075
  %vm1077 = vcmask 31744
  %s1078 = scalar_lea.vmem %s1, 437
  %1079 = vst.msk [vmem:[%s1078] ss:$-287 sm:$0x3] %vm1077, %v1076
  %s1080 = scalar_lea.vmem %s1, 598
  %1081 = vst.msk [vmem:[%s1080] sm:$0x4] %vm1077, %v1076
  %s1082 = scalar_lea.vmem %s0, 14
  %v1083 = vld [vmem:[%s1082] ss:$-7 sm:$0x7]
  %s1084 = scalar_lea.vmem %s0, 4
  %v1085 = vld.sshfl [vmem:[%s1084] sm:$0xff pattern:$0x4b07eeee]
  %vm1086 = vcmask 1047555
  %v1087 = vsel %vm1086, %v1085, %v1083
  %1088 = vrot.lane.b32.xlu0 %v1087, 20
  %v1089 = vpop.permute.xlu0 %1088
  %vm1090 = vcmask 31744
  %s1091 = scalar_lea.vmem %s1, 608
  %1092 = vst.msk [vmem:[%s1091] ss:$-287 sm:$0x7] %vm1090, %v1089
  %s1093 = scalar_lea.vmem %s1, 1632
  %1094 = vst.msk [vmem:[%s1093] ss:$-287 sm:$0x38] %vm1090, %v1089
  %s1095 = scalar_lea.vmem %s1, 2369
  %1096 = vst.msk [vmem:[%s1095] ss:$-287 sm:$0xc0] %vm1090, %v1089
  %s1097 = scalar_lea.vmem %s0, 1
  %v1098 = vld.sshfl [vmem:[%s1097] sm:$0xff pattern:$0x5c18f4b0]
  %1099 = vrot.lane.b32.xlu0 %v1098, 20
  %v1100 = vpop.permute.xlu0 %1099
  %vm1101 = vcmask 31744
  %s1102 = scalar_lea.vmem %s1, 73
  %1103 = vst.msk [vmem:[%s1102] ss:$450 sm:$0x3] %vm1101, %v1100
  %s1104 = scalar_lea.vmem %s1, 4294966632
  %1105 = vst.msk [vmem:[%s1104] ss:$450 sm:$0xc] %vm1101, %v1100
  %s1106 = scalar_lea.vmem %s1, 1547
  %1107 = vst.msk [vmem:[%s1106] ss:$-287 sm:$0x30] %vm1101, %v1100
  %s1108 = scalar_lea.vmem %s1, 2284
  %1109 = vst.msk [vmem:[%s1108] ss:$-287 sm:$0xc0] %vm1101, %v1100
  %s1110 = scalar_lea.vmem %s0, 17
  %v1111 = vld [vmem:[%s1110] ss:$-7 sm:$0x7]
  %1112 = vrot.lane.b32.xlu0 %v1111, 20
  %v1113 = vpop.permute.xlu0 %1112
  %vm1114 = vcmask 31744
  %s1115 = scalar_lea.vmem %s1, 725
  %1116 = vst.msk [vmem:[%s1115] ss:$-287 sm:$0x7] %vm1114, %v1113
  %s1117 = scalar_lea.vmem %s0, 14
  %v1118 = vld [vmem:[%s1117] ss:$-7 sm:$0x7]
  %s1119 = scalar_lea.vmem %s0, 4
  %v1120 = vld.sshfl [vmem:[%s1119] sm:$0xff pattern:$0x4b07eeee]
  %vm1121 = vcmask 1047555
  %v1122 = vsel %vm1121, %v1120, %v1118
  %1123 = vrot.lane.b32.xlu0 %v1122, 16
  %v1124 = vpop.permute.xlu0 %1123
  %vm1125 = vcmask 31744
  %s1126 = scalar_lea.vmem %s1, 609
  %1127 = vst.msk [vmem:[%s1126] ss:$-287 sm:$0x7] %vm1125, %v1124
  %s1128 = scalar_lea.vmem %s1, 1633
  %1129 = vst.msk [vmem:[%s1128] ss:$-287 sm:$0x38] %vm1125, %v1124
  %s1130 = scalar_lea.vmem %s1, 2370
  %1131 = vst.msk [vmem:[%s1130] ss:$-287 sm:$0xc0] %vm1125, %v1124
  %s1132 = scalar_lea.vmem %s0, 1
  %v1133 = vld.sshfl [vmem:[%s1132] sm:$0xff pattern:$0x5c18f4b0]
  %1134 = vrot.lane.b32.xlu0 %v1133, 16
  %v1135 = vpop.permute.xlu0 %1134
  %vm1136 = vcmask 31744
  %s1137 = scalar_lea.vmem %s1, 74
  %1138 = vst.msk [vmem:[%s1137] ss:$450 sm:$0x3] %vm1136, %v1135
  %s1139 = scalar_lea.vmem %s1, 4294966633
  %1140 = vst.msk [vmem:[%s1139] ss:$450 sm:$0xc] %vm1136, %v1135
  %s1141 = scalar_lea.vmem %s1, 1548
  %1142 = vst.msk [vmem:[%s1141] ss:$-287 sm:$0x30] %vm1136, %v1135
  %s1143 = scalar_lea.vmem %s1, 2285
  %1144 = vst.msk [vmem:[%s1143] ss:$-287 sm:$0xc0] %vm1136, %v1135
  %s1145 = scalar_lea.vmem %s0, 17
  %v1146 = vld [vmem:[%s1145] ss:$-7 sm:$0x7]
  %1147 = vrot.lane.b32.xlu0 %v1146, 16
  %v1148 = vpop.permute.xlu0 %1147
  %vm1149 = vcmask 31744
  %s1150 = scalar_lea.vmem %s1, 726
  %1151 = vst.msk [vmem:[%s1150] ss:$-287 sm:$0x7] %vm1149, %v1148
  %v1152 = vld.sshfl [vmem:[%s0] sm:$0xff pattern:$0x7e3]
  %s1153 = scalar_lea.vmem %s0, 4
  %v1154 = vld.sshfl [vmem:[%s1153] sm:$0xff pattern:$0xb07eeeee]
  %vm1155 = vcmask 1047556
  %v1156 = vsel %vm1155, %v1154, %v1152
  %1157 = vrot.lane.b32.xlu0 %v1156, 12
  %v1158 = vpop.permute.xlu0 %1157
  %vm1159 = vcmask 31744
  %s1160 = scalar_lea.vmem %s1, 160
  %1161 = vst.msk [vmem:[%s1160] ss:$450 sm:$0x3] %vm1159, %v1158
  %s1162 = scalar_lea.vmem %s1, 897
  %1163 = vst.msk [vmem:[%s1162] ss:$-287 sm:$0xc] %vm1159, %v1158
  %s1164 = scalar_lea.vmem %s1, 1921
  %1165 = vst.msk [vmem:[%s1164] ss:$-287 sm:$0x70] %vm1159, %v1158
  %s1166 = scalar_lea.vmem %s1, 642
  %1167 = vst.msk [vmem:[%s1166] sm:$0x80] %vm1159, %v1158
  %s1168 = scalar_lea.vmem %s0, 1
  %v1169 = vld.sshfl [vmem:[%s1168] sm:$0xff pattern:$0xc18f4b07]
  %1170 = vrot.lane.b32.xlu0 %v1169, 12
  %v1171 = vpop.permute.xlu0 %1170
  %vm1172 = vcmask 31744
  %s1173 = scalar_lea.vmem %s1, 362
  %1174 = vst.msk [vmem:[%s1173] ss:$-287 sm:$0x3] %vm1172, %v1171
  %s1175 = scalar_lea.vmem %s1, 1099
  %1176 = vst.msk [vmem:[%s1175] ss:$-287 sm:$0xc] %vm1172, %v1171
  %s1177 = scalar_lea.vmem %s1, 1836
  %1178 = vst.msk [vmem:[%s1177] ss:$-287 sm:$0x70] %vm1172, %v1171
  %s1179 = scalar_lea.vmem %s1, 557
  %1180 = vst.msk [vmem:[%s1179] sm:$0x80] %vm1172, %v1171
  %s1181 = scalar_lea.vmem %s0, 6
  %v1182 = vld.sshfl [vmem:[%s1181] sm:$0xff pattern:$0x444444b0]
  %1183 = vrot.lane.b32.xlu0 %v1182, 12
  %v1184 = vpop.permute.xlu0 %1183
  %vm1185 = vcmask 31744
  %s1186 = scalar_lea.vmem %s1, 277
  %1187 = vst.msk [vmem:[%s1186] ss:$450 sm:$0x3] %vm1185, %v1184
  %s1188 = scalar_lea.vmem %s1, 438
  %1189 = vst.msk [vmem:[%s1188] sm:$0x4] %vm1185, %v1184
  %v1190 = vld.sshfl [vmem:[%s0] sm:$0xff pattern:$0x7e3a]
  %s1191 = scalar_lea.vmem %s0, 53
  %v1192 = vld [vmem:[%s1191] ss:$-7 sm:$0xe0]
  %vm1193 = vcmask 1047557
  %v1194 = vsel %vm1193, %v1192, %v1190
  %1195 = vrot.lane.b32.xlu0 %v1194, 8
  %v1196 = vpop.permute.xlu0 %1195
  %vm1197 = vcmask 31744
  %s1198 = scalar_lea.vmem %s1, 448
  %1199 = vst.msk [vmem:[%s1198] ss:$-287 sm:$0x3] %vm1197, %v1196
  %s1200 = scalar_lea.vmem %s1, 1185
  %1201 = vst.msk [vmem:[%s1200] ss:$-287 sm:$0x1c] %vm1197, %v1196
  %s1202 = scalar_lea.vmem %s1, 2209
  %1203 = vst.msk [vmem:[%s1202] ss:$-287 sm:$0xe0] %vm1197, %v1196
  %s1204 = scalar_lea.vmem %s0, 1
  %v1205 = vld.sshfl [vmem:[%s1204] sm:$0xff pattern:$0x18f4b07e]
  %1206 = vrot.lane.b32.xlu0 %v1205, 8
  %v1207 = vpop.permute.xlu0 %1206
  %vm1208 = vcmask 31744
  %s1209 = scalar_lea.vmem %s1, 650
  %1210 = vst.msk [vmem:[%s1209] ss:$-287 sm:$0x7] %vm1208, %v1207
  %s1211 = scalar_lea.vmem %s1, 1387
  %1212 = vst.msk [vmem:[%s1211] ss:$-287 sm:$0x18] %vm1208, %v1207
  %s1213 = scalar_lea.vmem %s1, 2124
  %1214 = vst.msk [vmem:[%s1213] ss:$-287 sm:$0xe0] %vm1208, %v1207
  %s1215 = scalar_lea.vmem %s0, 6
  %v1216 = vld.sshfl [vmem:[%s1215] sm:$0xff pattern:$0xbbbbbb07]
  %1217 = vrot.lane.b32.xlu0 %v1216, 8
  %v1218 = vpop.permute.xlu0 %1217
  %vm1219 = vcmask 31744
  %s1220 = scalar_lea.vmem %s1, 565
  %1221 = vst.msk [vmem:[%s1220] ss:$-287 sm:$0x3] %vm1219, %v1218
  %s1222 = scalar_lea.vmem %s1, 726
  %1223 = vst.msk [vmem:[%s1222] sm:$0x4] %vm1219, %v1218
  %s1224 = scalar_lea.vmem %s0, 3
  %v1225 = vld.sshfl [vmem:[%s1224] sm:$0xff pattern:$0x4444b07e]
  %s1226 = scalar_lea.vmem %s0, 4294967206
  %s1227 = smov 96
  %v1228 = vld [vmem:[%s1226] ss:$18 sm:%s1227]
  %vm1229 = vcmask 1046533
  %v1230 = vsel %vm1229, %v1228, %v1225
  %s1231 = scalar_lea.vmem %s0, 4
  %v1232 = vld [vmem:[%s1231] sm:$0x80]
  %vm1233 = vcmask 1047559
  %v1234 = vsel %vm1233, %v1232, %v1230
  %1235 = vrot.lane.b32.xlu0 %v1234, 4
  %v1236 = vpop.permute.xlu0 %1235
  %vm1237 = vcmask 31744
  %s1238 = scalar_lea.vmem %s1, 736
  %1239 = vst.msk [vmem:[%s1238] ss:$-287 sm:$0x7] %vm1237, %v1236
  %s1240 = scalar_lea.vmem %s1, 1473
  %1241 = vst.msk [vmem:[%s1240] ss:$-287 sm:$0x38] %vm1237, %v1236
  %s1242 = scalar_lea.vmem %s1, 2497
  %1243 = vst.msk [vmem:[%s1242] ss:$-287 sm:$0xc0] %vm1237, %v1236
  %s1244 = scalar_lea.vmem %s0, 1
  %v1245 = vld.sshfl [vmem:[%s1244] sm:$0xff pattern:$0x8f4b07e3]
  %1246 = vrot.lane.b32.xlu0 %v1245, 4
  %v1247 = vpop.permute.xlu0 %1246
  %vm1248 = vcmask 31744
  %s1249 = scalar_lea.vmem %s1, 201
  %1250 = vst.msk [vmem:[%s1249] ss:$450 sm:$0x3] %vm1248, %v1247
  %s1251 = scalar_lea.vmem %s1, 938
  %1252 = vst.msk [vmem:[%s1251] ss:$-287 sm:$0xc] %vm1248, %v1247
  %s1253 = scalar_lea.vmem %s1, 1675
  %1254 = vst.msk [vmem:[%s1253] ss:$-287 sm:$0x30] %vm1248, %v1247
  %s1255 = scalar_lea.vmem %s1, 2412
  %1256 = vst.msk [vmem:[%s1255] ss:$-287 sm:$0xc0] %vm1248, %v1247
  %s1257 = scalar_lea.vmem %s0, 2
  %v1258 = vld.sshfl [vmem:[%s1257] sm:$0xff pattern:$0x444444b0]
  %1259 = vrot.lane.b32.xlu0 %v1258, 4
  %v1260 = vpop.permute.xlu0 %1259
  %vm1261 = vcmask 31744
  %s1262 = scalar_lea.vmem %s1, 116
  %1263 = vst.msk [vmem:[%s1262] ss:$450 sm:$0x3] %vm1261, %v1260
  %s1264 = scalar_lea.vmem %s1, 277
  %1265 = vst.msk [vmem:[%s1264] sm:$0x4] %vm1261, %v1260

// kernel: net_forward.1
$region0: #{net_forward.1}
  #allocation0 [shape = 'u32[]', space=smem, size = 0x4, offset = 0x4, fixed_abs, tag = 'smem constant byte address 0x4 - core index']
  #allocation1 [shape = 'u32[72,128]{1,0:T(1,128)}', space=vmem, size = 0x9000, scoped, tag = 'internal scratch']
  %s0 = inlined_call_operand.vmem [shape: f32[8,4], index: 0, kind: input, shape index: {}]
  %s1 = inlined_call_operand.vmem [shape: bf16[4,50], index: 1, kind: input, shape index: {}]
  %s2 = inlined_call_operand.vmem [shape: bf16[50,256], index: 2, kind: input, shape index: {}]
  %s3 = inlined_call_operand.vmem [shape: bf16[256,50], index: 3, kind: input, shape index: {}]
  %s4 = inlined_call_operand.hbm [shape: bf16[50,2560], index: 4, kind: input, shape index: {}]
  %s5 = inlined_call_operand.vmem [shape: f32[8,2560], index: 5, kind: output, shape index: {}]
  %s6 = sld [smem:[#allocation0]]
  $region34: #{net_forward.1} parent=0
    _
  %s8 = ssub.s32 1, %s6
  %s9 = scalar_select 0, %s8, %s6
  $region1: #{net_forward.1} parent=0
    #allocation2 [shape = 'u8[286720]{0}', space=vmem, size = 0x46000, scoped, tag = 'input window, operand 4, single buffered']
    #allocation3 [shape = 's32[1]{0}', space=sflag, size = 0x4, scoped, tag = 'scoped memory for net_forward.1']
    %10 = vsyncpa [#allocation3], 0
    // Predicated region
    $region2: #{net_forward.1} parent=1 // pred_check
      _
    $region3: #{net_forward.1} parent=1 // pred_check_branch
      %12 = sbr.rel (0) target = $region5
    $region4: #{net_forward.1} parent=1 // pred_region
      _
    $region5: #{net_forward.1} parent=1 // pred_fallthru
      _
    // Predicated region
    $region6: #{net_forward.1} parent=1 // pred_check
      _
    $region7: #{net_forward.1} parent=1 // pred_check_branch
      %14 = sbr.rel (0) target = $region9
    $region8: #{net_forward.1} parent=1 // pred_region
      _
    $region9: #{net_forward.1} parent=1 // pred_fallthru
      _
    // Predicated region
    $region10: #{net_forward.1} parent=1 // pred_check
      _
    $region11: #{net_forward.1} parent=1 // pred_check_branch
      %16 = sbr.rel (0) target = $region13
    $region12: #{net_forward.1} parent=1 // pred_region
      _
    $region13: #{net_forward.1} parent=1 // pred_fallthru
      _
    // Predicated region
    $region14: #{net_forward.1} parent=1 // pred_check
      _
    $region15: #{net_forward.1} parent=1 // pred_check_branch
      %18 = sbr.rel (0) target = $region17
    $region16: #{net_forward.1} parent=1 // pred_region
      _
    $region17: #{net_forward.1} parent=1 // pred_fallthru
      _
    // Predicated region
    $region18: #{net_forward.1} parent=1 // pred_check
      _
    $region19: #{net_forward.1} parent=1 // pred_check_branch
      %20 = sbr.rel (0) target = $region21
    $region20: #{net_forward.1} parent=1 // pred_region
      %22 = vsyncadd [#allocation3], 0
      %s23 = sshll.u32 %s4, 4
      %s24 = int_to_ptr.hbm [resolvable:$true] %s23
      %s25 = sshll.u32 [#allocation2], 4
      %s26 = int_to_ptr.vmem [resolvable:$true] %s25
      %31 = dma.hbm_to_vmem [thread:$0]  %s24, 8960, %s26, [#allocation3], 1280, 1280, 80
    $region21: #{net_forward.1} parent=1 // pred_fallthru
      _
    // Predicated region
    $region22: #{net_forward.1} parent=1 // pred_check
      _
    $region23: #{net_forward.1} parent=1 // pred_check_branch
      %33 = sbr.rel (0) target = $region25
    $region24: #{net_forward.1} parent=1 // pred_region
      %35 = dma.done [#allocation3], 8960
    $region25: #{net_forward.1} parent=1 // pred_fallthru
      _
    %v37 = vld [vmem:[%s0] sm:$0xff]
    %v38 = vld [vmem:[%s1] sm:$0x3]
    %v39 = vunpack.c.l.bf16 %v38
    %41 = vset.pattern.permute.xlu0 0
    %42 = vperm.xlu0 %41, %v37
    %v43 = vpop.permute.xlu0 %42
    %v45 = vperm.slane %v39, 0
    %v46 = vmul.f32 %v43, %v45
    %47 = vset.pattern.permute.xlu0 1
    %48 = vperm.xlu0 %47, %v37
    %v49 = vpop.permute.xlu0 %48
    %v51 = vperm.slane %v39, 1
    %v52 = vmul.f32 %v49, %v51
    %v53 = vadd.f32 %v46, %v52
    %54 = vset.pattern.permute.xlu0 2
    %55 = vperm.xlu0 %54, %v37
    %v56 = vpop.permute.xlu0 %55
    %v58 = vperm.slane %v39, 2
    %v59 = vmul.f32 %v56, %v58
    %v60 = vadd.f32 %v53, %v59
    %61 = vset.pattern.permute.xlu0 3
    %62 = vperm.xlu0 %61, %v37
    %v63 = vpop.permute.xlu0 %62
    %v65 = vperm.slane %v39, 3
    %v66 = vmul.f32 %v63, %v65
    %v67 = vadd.f32 %v60, %v66
    %vm68 = vcmask 408576
    %v69 = vsel %vm68, %v67, -inf
    %70 = vmax.xlane.f32.xlu0 %v69
    %v71 = vpop.xlane.xlu0 %70
    %v72 = vsub.f32 %v67, %v71
    %v73 = vmul.f32 %v72, 1.442695
    %v74 = vpow.pop %v73
    %v75 = vsel %vm68, %v74, 0.0
    %76 = vadd.xlane.f32.xlu0 %v75
    %v77 = vpop.xlane.xlu0 %76
    %v78 = vrcp.pop %v77
    %v79 = vmul.f32 %v77, %v78
    %v80 = vsub.f32 1.0, %v79
    %v81 = vmul.f32 %v78, %v80
    %v82 = vadd.f32 %v78, %v81
    %vm83 = vweird.f32 %v77
    %vm84 = vweird.f32 %v78
    %vm85 = vmor %vm83, %vm84
    %v86 = vsel %vm85, %v78, %v82
    %v87 = vand.u32 2147483647, %v77
    %vm88 = vcmp.eq.f32.partialorder %v87, 8.507059e+37
    %v89 = vand.u32 %v77, 2147483648
    %v90 = vor.u32 1.1754944e-38, %v89
    %v91 = vsel %vm88, %v90, %v86
    %v92 = vmul.f32 %v74, %v91
    %v93 = vpack.c.bf16 %v92, %v92
    %v94 = vld [vmem:[%s2] sm:$0xff]
    %v95 = vld [vmem:[%s2 + $0x8] sm:$0xff]
    %v96 = vld [vmem:[%s2 + $0x10] sm:$0xff]
    %v97 = vld [vmem:[%s2 + $0x18] sm:$0xff]
    %v98 = vld [vmem:[%s2 + $0x20] sm:$0xff]
    %v99 = vld [vmem:[%s2 + $0x28] sm:$0xff]
    %v100 = vld [vmem:[%s2 + $0x30] sm:$0x11]
    %v108 = vunpack.c.l.b16 %v94
    %v109 = vunpack.c.h.b16 %v94
    %v110 = vunpack.c.l.b16 %v95
    %v111 = vunpack.c.h.b16 %v95
    %v112 = vunpack.c.l.b16 %v96
    %v113 = vunpack.c.h.b16 %v96
    %v114 = vunpack.c.l.b16 %v97
    %v115 = vunpack.c.h.b16 %v97
    %v116 = vunpack.c.l.b16 %v98
    %v117 = vunpack.c.h.b16 %v98
    %v118 = vunpack.c.l.b16 %v99
    %v119 = vunpack.c.h.b16 %v99
    %v120 = vunpack.c.l.b16 %v100
    %v121 = vunpack.c.h.b16 %v100
    %v122 = vpack.c.b16 %v110, %v108
    %v123 = vpack.c.b16 %v111, %v109
    %v124 = vpack.c.b16 %v114, %v112
    %v125 = vpack.c.b16 %v115, %v113
    %v126 = vpack.c.b16 %v118, %v116
    %v127 = vpack.c.b16 %v119, %v117
    %v128 = vpack.c.b16 %v120, %v120
    %v129 = vpack.c.b16 %v121, %v121
    %v137 = vsel %vm68, %v93, 0
    %vm139 = vcmask 1040384
    %v141 = vsel %vm139, %v128, 0
    %v144 = vsel %vm139, %v129, 0
    %146 = vmatpush.bf16.msra.mxu0 0
    %147 = vmatpush.bf16.msra.mxu0 0
    %148 = vmatpush.bf16.msra.mxu0 0
    %149 = vmatpush.bf16.msra.mxu0 0
    %150 = vmatpush.bf16.msra.mxu0 %v141
    %151 = vmatpush.bf16.msra.mxu0 %v126
    %152 = vmatpush.bf16.msra.mxu0 %v124
    %153 = vmatpush.bf16.msra.mxu0 %v122
    %154 = vmatmul.bf16.gmra.mxu0 %v137
    %v155 = vpop.f32.mrf.mxu0
    %v156 = vadd.f32 0.0, %v155
    %v157 = vpop.f32.mrf.mxu0
    %158 = vdwg.mxu0
    %159 = vmatpush.bf16.msra.mxu0 0
    %160 = vmatpush.bf16.msra.mxu0 0
    %161 = vmatpush.bf16.msra.mxu0 0
    %162 = vmatpush.bf16.msra.mxu0 0
    %163 = vmatpush.bf16.msra.mxu0 %v144
    %164 = vmatpush.bf16.msra.mxu0 %v127
    %165 = vmatpush.bf16.msra.mxu0 %v125
    %166 = vmatpush.bf16.msra.mxu0 %v123
    %167 = vmatmul.bf16.gmra.mxu0 %v137
    %v168 = vpop.f32.mrf.mxu0
    %v169 = vadd.f32 0.0, %v168
    %v170 = vpop.f32.mrf.mxu0
    %171 = vdwg.mxu0
    %v172 = vmax.f32 %v156, 0.0
    %v173 = vmax.f32 %v169, 0.0
    %v174 = vpack.c.bf16 %v172, %v172
    %v175 = vpack.c.bf16 %v173, %v173
    %v176 = vld [vmem:[%s3] sm:$0xf]
    %v177 = vld [vmem:[%s3 + $0x4] sm:$0xf]
    %v178 = vld [vmem:[%s3 + $0x8] sm:$0xf]
    %v179 = vld [vmem:[%s3 + $0xc] sm:$0xf]
    %v180 = vld [vmem:[%s3 + $0x10] sm:$0xf]
    %v181 = vld [vmem:[%s3 + $0x14] sm:$0xf]
    %v182 = vld [vmem:[%s3 + $0x18] sm:$0xf]
    %v183 = vld [vmem:[%s3 + $0x1c] sm:$0xf]
    %v184 = vld [vmem:[%s3 + $0x20] sm:$0xf]
    %v185 = vld [vmem:[%s3 + $0x24] sm:$0xf]
    %v186 = vld [vmem:[%s3 + $0x28] sm:$0xf]
    %v187 = vld [vmem:[%s3 + $0x2c] sm:$0xf]
    %v188 = vld [vmem:[%s3 + $0x30] sm:$0xf]
    %v189 = vld [vmem:[%s3 + $0x34] sm:$0xf]
    %v190 = vld [vmem:[%s3 + $0x38] sm:$0xf]
    %v191 = vld [vmem:[%s3 + $0x3c] sm:$0xf]
    %v192 = vld [vmem:[%s3 + $0x40] sm:$0xf]
    %v193 = vld [vmem:[%s3 + $0x44] sm:$0xf]
    %v194 = vld [vmem:[%s3 + $0x48] sm:$0xf]
    %v195 = vld [vmem:[%s3 + $0x4c] sm:$0xf]
    %v196 = vld [vmem:[%s3 + $0x50] sm:$0xf]
    %v197 = vld [vmem:[%s3 + $0x54] sm:$0xf]
    %v198 = vld [vmem:[%s3 + $0x58] sm:$0xf]
    %v199 = vld [vmem:[%s3 + $0x5c] sm:$0xf]
    %v200 = vld [vmem:[%s3 + $0x60] sm:$0xf]
    %v201 = vld [vmem:[%s3 + $0x64] sm:$0xf]
    %v202 = vld [vmem:[%s3 + $0x68] sm:$0xf]
    %v203 = vld [vmem:[%s3 + $0x6c] sm:$0xf]
    %v204 = vld [vmem:[%s3 + $0x70] sm:$0xf]
    %v205 = vld [vmem:[%s3 + $0x74] sm:$0xf]
    %v206 = vld [vmem:[%s3 + $0x78] sm:$0xf]
    %v207 = vld [vmem:[%s3 + $0x7c] sm:$0xf]
    %v240 = vunpack.c.l.b16 %v176
    %v241 = vunpack.c.l.b16 %v177
    %v242 = vunpack.c.l.b16 %v178
    %v243 = vunpack.c.l.b16 %v179
    %v244 = vunpack.c.l.b16 %v180
    %v245 = vunpack.c.l.b16 %v181
    %v246 = vunpack.c.l.b16 %v182
    %v247 = vunpack.c.l.b16 %v183
    %v248 = vunpack.c.l.b16 %v184
    %v249 = vunpack.c.l.b16 %v185
    %v250 = vunpack.c.l.b16 %v186
    %v251 = vunpack.c.l.b16 %v187
    %v252 = vunpack.c.l.b16 %v188
    %v253 = vunpack.c.l.b16 %v189
    %v254 = vunpack.c.l.b16 %v190
    %v255 = vunpack.c.l.b16 %v191
    %v256 = vunpack.c.l.b16 %v192
    %v257 = vunpack.c.l.b16 %v193
    %v258 = vunpack.c.l.b16 %v194
    %v259 = vunpack.c.l.b16 %v195
    %v260 = vunpack.c.l.b16 %v196
    %v261 = vunpack.c.l.b16 %v197
    %v262 = vunpack.c.l.b16 %v198
    %v263 = vunpack.c.l.b16 %v199
    %v264 = vunpack.c.l.b16 %v200
    %v265 = vunpack.c.l.b16 %v201
    %v266 = vunpack.c.l.b16 %v202
    %v267 = vunpack.c.l.b16 %v203
    %v268 = vunpack.c.l.b16 %v204
    %v269 = vunpack.c.l.b16 %v205
    %v270 = vunpack.c.l.b16 %v206
    %v271 = vunpack.c.l.b16 %v207
    %v272 = vpack.c.b16 %v241, %v240
    %v273 = vpack.c.b16 %v243, %v242
    %v274 = vpack.c.b16 %v245, %v244
    %v275 = vpack.c.b16 %v247, %v246
    %v276 = vpack.c.b16 %v249, %v248
    %v277 = vpack.c.b16 %v251, %v250
    %v278 = vpack.c.b16 %v253, %v252
    %v279 = vpack.c.b16 %v255, %v254
    %v280 = vpack.c.b16 %v257, %v256
    %v281 = vpack.c.b16 %v259, %v258
    %v282 = vpack.c.b16 %v261, %v260
    %v283 = vpack.c.b16 %v263, %v262
    %v284 = vpack.c.b16 %v265, %v264
    %v285 = vpack.c.b16 %v267, %v266
    %v286 = vpack.c.b16 %v269, %v268
    %v287 = vpack.c.b16 %v271, %v270
    %304 = vmatpush.bf16.msra.mxu0 %v279
    %305 = vmatpush.bf16.msra.mxu0 %v278
    %306 = vmatpush.bf16.msra.mxu0 %v277
    %307 = vmatpush.bf16.msra.mxu0 %v276
    %308 = vmatpush.bf16.msra.mxu0 %v275
    %309 = vmatpush.bf16.msra.mxu0 %v274
    %310 = vmatpush.bf16.msra.mxu0 %v273
    %311 = vmatpush.bf16.msra.mxu0 %v272
    %312 = vmatmul.bf16.gmra.mxu0 %v174
    %v313 = vpop.f32.mrf.mxu0
    %v314 = vadd.f32 0.0, %v313
    %v315 = vpop.f32.mrf.mxu0
    %316 = vdwg.mxu0
    %317 = vmatpush.bf16.msra.mxu0 %v287
    %318 = vmatpush.bf16.msra.mxu0 %v286
    %319 = vmatpush.bf16.msra.mxu0 %v285
    %320 = vmatpush.bf16.msra.mxu0 %v284
    %321 = vmatpush.bf16.msra.mxu0 %v283
    %322 = vmatpush.bf16.msra.mxu0 %v282
    %323 = vmatpush.bf16.msra.mxu0 %v281
    %324 = vmatpush.bf16.msra.mxu0 %v280
    %325 = vmatmul.bf16.gmra.mxu0 %v175
    %v326 = vpop.f32.mrf.mxu0
    %v327 = vadd.f32 %v314, %v326
    %v328 = vpop.f32.mrf.mxu0
    %329 = vdwg.mxu0
    %v330 = vsel %vm68, %v327, -inf
    %331 = vmax.xlane.f32.xlu0 %v330
    %v332 = vpop.xlane.xlu0 %331
    %v333 = vsub.f32 %v327, %v332
    %v334 = vmul.f32 %v333, 1.442695
    %v335 = vpow.pop %v334
    %v336 = vsel %vm68, %v335, 0.0
    %337 = vadd.xlane.f32.xlu0 %v336
    %v338 = vpop.xlane.xlu0 %337
    %v339 = vrcp.pop %v338
    %v340 = vmul.f32 %v335, %v339
    %v341 = vpack.c.bf16 %v340, %v340
    %v342 = vld [vmem:[#allocation2] sm:$0xff]
    %v343 = vld [vmem:[#allocation2 + $0x8] sm:$0xff]
    %v344 = vld [vmem:[#allocation2 + $0x10] sm:$0xff]
    %v345 = vld [vmem:[#allocation2 + $0x18] sm:$0xff]
    %v346 = vld [vmem:[#allocation2 + $0x20] sm:$0xff]
    %v347 = vld [vmem:[#allocation2 + $0x28] sm:$0xff]
    %v348 = vld [vmem:[#allocation2 + $0x30] sm:$0xff]
    %v349 = vld [vmem:[#allocation2 + $0x38] sm:$0xff]
    %v350 = vld [vmem:[#allocation2 + $0x40] sm:$0xff]
    %v351 = vld [vmem:[#allocation2 + $0x48] sm:$0xff]
    %v352 = vld [vmem:[#allocation2 + $0x50] sm:$0xff]
    %v353 = vld [vmem:[#allocation2 + $0x58] sm:$0xff]
    %v354 = vld [vmem:[#allocation2 + $0x60] sm:$0xff]
    %v355 = vld [vmem:[#allocation2 + $0x68] sm:$0xff]
    %v356 = vld [vmem:[#allocation2 + $0x70] sm:$0xff]
    %v357 = vld [vmem:[#allocation2 + $0x78] sm:$0xff]
    %v358 = vld [vmem:[#allocation2 + $0x80] sm:$0xff]
    %v359 = vld [vmem:[#allocation2 + $0x88] sm:$0xff]
    %v360 = vld [vmem:[#allocation2 + $0x90] sm:$0xff]
    %v361 = vld [vmem:[#allocation2 + $0x98] sm:$0xff]
    %v362 = vld [vmem:[#allocation2 + $0xa0] sm:$0xff]
    %v363 = vld [vmem:[#allocation2 + $0xa8] sm:$0xff]
    %v364 = vld [vmem:[#allocation2 + $0xb0] sm:$0xff]
    %v365 = vld [vmem:[#allocation2 + $0xb8] sm:$0xff]
    %v366 = vld [vmem:[#allocation2 + $0xc0] sm:$0xff]
    %v367 = vld [vmem:[#allocation2 + $0xc8] sm:$0xff]
    %v368 = vld [vmem:[#allocation2 + $0xd0] sm:$0xff]
    %v369 = vld [vmem:[#allocation2 + $0xd8] sm:$0xff]
    %v370 = vld [vmem:[#allocation2 + $0xe0] sm:$0xff]
    %v371 = vld [vmem:[#allocation2 + $0xe8] sm:$0xff]
    %v372 = vld [vmem:[#allocation2 + $0xf0] sm:$0xff]
    %v373 = vld [vmem:[#allocation2 + $0xf8] sm:$0xff]
    %v374 = vld [vmem:[#allocation2 + $0x100] sm:$0xff]
    %v375 = vld [vmem:[#allocation2 + $0x108] sm:$0xff]
    %v376 = vld [vmem:[#allocation2 + $0x110] sm:$0xff]
    %v377 = vld [vmem:[#allocation2 + $0x118] sm:$0xff]
    %v378 = vld [vmem:[#allocation2 + $0x120] sm:$0xff]
    %v379 = vld [vmem:[#allocation2 + $0x128] sm:$0xff]
    %v380 = vld [vmem:[#allocation2 + $0x130] sm:$0xff]
    %v381 = vld [vmem:[#allocation2 + $0x138] sm:$0xff]
    %v382 = vld [vmem:[#allocation2 + $0x140] sm:$0xff]
    %v383 = vld [vmem:[#allocation2 + $0x148] sm:$0xff]
    %v384 = vld [vmem:[#allocation2 + $0x150] sm:$0xff]
    %v385 = vld [vmem:[#allocation2 + $0x158] sm:$0xff]
    %v386 = vld [vmem:[#allocation2 + $0x160] sm:$0xff]
    %v387 = vld [vmem:[#allocation2 + $0x168] sm:$0xff]
    %v388 = vld [vmem:[#allocation2 + $0x170] sm:$0xff]
    %v389 = vld [vmem:[#allocation2 + $0x178] sm:$0xff]
    %v390 = vld [vmem:[#allocation2 + $0x180] sm:$0xff]
    %v391 = vld [vmem:[#allocation2 + $0x188] sm:$0xff]
    %v392 = vld [vmem:[#allocation2 + $0x190] sm:$0xff]
    %v393 = vld [vmem:[#allocation2 + $0x198] sm:$0xff]
    %v394 = vld [vmem:[#allocation2 + $0x1a0] sm:$0xff]
    %v395 = vld [vmem:[#allocation2 + $0x1a8] sm:$0xff]
    %v396 = vld [vmem:[#allocation2 + $0x1b0] sm:$0xff]
    %v397 = vld [vmem:[#allocation2 + $0x1b8] sm:$0xff]
    %v398 = vld [vmem:[#allocation2 + $0x1c0] sm:$0xff]
    %v399 = vld [vmem:[#allocation2 + $0x1c8] sm:$0xff]
    %v400 = vld [vmem:[#allocation2 + $0x1d0] sm:$0xff]
    %v401 = vld [vmem:[#allocation2 + $0x1d8] sm:$0xff]
    %v402 = vld [vmem:[#allocation2 + $0x1e0] sm:$0x11]
    %v403 = vld [vmem:[#allocation2 + $0x1e8] sm:$0x11]
    %v404 = vld [vmem:[#allocation2 + $0x1f0] sm:$0x11]
    %v405 = vld [vmem:[#allocation2 + $0x1f8] sm:$0x11]
    %v406 = vld [vmem:[#allocation2 + $0x200] sm:$0x11]
    %v407 = vld [vmem:[#allocation2 + $0x208] sm:$0x11]
    %v408 = vld [vmem:[#allocation2 + $0x210] sm:$0x11]
    %v409 = vld [vmem:[#allocation2 + $0x218] sm:$0x11]
    %v410 = vld [vmem:[#allocation2 + $0x220] sm:$0x11]
    %v411 = vld [vmem:[#allocation2 + $0x228] sm:$0x11]
    %v482 = vunpack.c.l.b16 %v342
    %v483 = vunpack.c.h.b16 %v342
    %v484 = vunpack.c.l.b16 %v343
    %v485 = vunpack.c.h.b16 %v343
    %v486 = vunpack.c.l.b16 %v344
    %v487 = vunpack.c.h.b16 %v344
    %v488 = vunpack.c.l.b16 %v345
    %v489 = vunpack.c.h.b16 %v345
    %v490 = vunpack.c.l.b16 %v346
    %v491 = vunpack.c.h.b16 %v346
    %v492 = vunpack.c.l.b16 %v347
    %v493 = vunpack.c.h.b16 %v347
    %v494 = vunpack.c.l.b16 %v348
    %v495 = vunpack.c.h.b16 %v348
    %v496 = vunpack.c.l.b16 %v349
    %v497 = vunpack.c.h.b16 %v349
    %v498 = vunpack.c.l.b16 %v350
    %v499 = vunpack.c.h.b16 %v350
    %v500 = vunpack.c.l.b16 %v351
    %v501 = vunpack.c.h.b16 %v351
    %v502 = vunpack.c.l.b16 %v352
    %v503 = vunpack.c.h.b16 %v352
    %v504 = vunpack.c.l.b16 %v353
    %v505 = vunpack.c.h.b16 %v353
    %v506 = vunpack.c.l.b16 %v354
    %v507 = vunpack.c.h.b16 %v354
    %v508 = vunpack.c.l.b16 %v355
    %v509 = vunpack.c.h.b16 %v355
    %v510 = vunpack.c.l.b16 %v356
    %v511 = vunpack.c.h.b16 %v356
    %v512 = vunpack.c.l.b16 %v357
    %v513 = vunpack.c.h.b16 %v357
    %v514 = vunpack.c.l.b16 %v358
    %v515 = vunpack.c.h.b16 %v358
    %v516 = vunpack.c.l.b16 %v359
    %v517 = vunpack.c.h.b16 %v359
    %v518 = vunpack.c.l.b16 %v360
    %v519 = vunpack.c.h.b16 %v360
    %v520 = vunpack.c.l.b16 %v361
    %v521 = vunpack.c.h.b16 %v361
    %v522 = vunpack.c.l.b16 %v362
    %v523 = vunpack.c.h.b16 %v362
    %v524 = vunpack.c.l.b16 %v363
    %v525 = vunpack.c.h.b16 %v363
    %v526 = vunpack.c.l.b16 %v364
    %v527 = vunpack.c.h.b16 %v364
    %v528 = vunpack.c.l.b16 %v365
    %v529 = vunpack.c.h.b16 %v365
    %v530 = vunpack.c.l.b16 %v366
    %v531 = vunpack.c.h.b16 %v366
    %v532 = vunpack.c.l.b16 %v367
    %v533 = vunpack.c.h.b16 %v367
    %v534 = vunpack.c.l.b16 %v368
    %v535 = vunpack.c.h.b16 %v368
    %v536 = vunpack.c.l.b16 %v369
    %v537 = vunpack.c.h.b16 %v369
    %v538 = vunpack.c.l.b16 %v370
    %v539 = vunpack.c.h.b16 %v370
    %v540 = vunpack.c.l.b16 %v371
    %v541 = vunpack.c.h.b16 %v371
    %v542 = vunpack.c.l.b16 %v372
    %v543 = vunpack.c.h.b16 %v372
    %v544 = vunpack.c.l.b16 %v373
    %v545 = vunpack.c.h.b16 %v373
    %v546 = vunpack.c.l.b16 %v374
    %v547 = vunpack.c.h.b16 %v374
    %v548 = vunpack.c.l.b16 %v375
    %v549 = vunpack.c.h.b16 %v375
    %v550 = vunpack.c.l.b16 %v376
    %v551 = vunpack.c.h.b16 %v376
    %v552 = vunpack.c.l.b16 %v377
    %v553 = vunpack.c.h.b16 %v377
    %v554 = vunpack.c.l.b16 %v378
    %v555 = vunpack.c.h.b16 %v378
    %v556 = vunpack.c.l.b16 %v379
    %v557 = vunpack.c.h.b16 %v379
    %v558 = vunpack.c.l.b16 %v380
    %v559 = vunpack.c.h.b16 %v380
    %v560 = vunpack.c.l.b16 %v381
    %v561 = vunpack.c.h.b16 %v381
    %v562 = vunpack.c.l.b16 %v382
    %v563 = vunpack.c.h.b16 %v382
    %v564 = vunpack.c.l.b16 %v383
    %v565 = vunpack.c.h.b16 %v383
    %v566 = vunpack.c.l.b16 %v384
    %v567 = vunpack.c.h.b16 %v384
    %v568 = vunpack.c.l.b16 %v385
    %v569 = vunpack.c.h.b16 %v385
    %v570 = vunpack.c.l.b16 %v386
    %v571 = vunpack.c.h.b16 %v386
    %v572 = vunpack.c.l.b16 %v387
    %v573 = vunpack.c.h.b16 %v387
    %v574 = vunpack.c.l.b16 %v388
    %v575 = vunpack.c.h.b16 %v388
    %v576 = vunpack.c.l.b16 %v389
    %v577 = vunpack.c.h.b16 %v389
    %v578 = vunpack.c.l.b16 %v390
    %v579 = vunpack.c.h.b16 %v390
    %v580 = vunpack.c.l.b16 %v391
    %v581 = vunpack.c.h.b16 %v391
    %v582 = vunpack.c.l.b16 %v392
    %v583 = vunpack.c.h.b16 %v392
    %v584 = vunpack.c.l.b16 %v393
    %v585 = vunpack.c.h.b16 %v393
    %v586 = vunpack.c.l.b16 %v394
    %v587 = vunpack.c.h.b16 %v394
    %v588 = vunpack.c.l.b16 %v395
    %v589 = vunpack.c.h.b16 %v395
    %v590 = vunpack.c.l.b16 %v396
    %v591 = vunpack.c.h.b16 %v396
    %v592 = vunpack.c.l.b16 %v397
    %v593 = vunpack.c.h.b16 %v397
    %v594 = vunpack.c.l.b16 %v398
    %v595 = vunpack.c.h.b16 %v398
    %v596 = vunpack.c.l.b16 %v399
    %v597 = vunpack.c.h.b16 %v399
    %v598 = vunpack.c.l.b16 %v400
    %v599 = vunpack.c.h.b16 %v400
    %v600 = vunpack.c.l.b16 %v401
    %v601 = vunpack.c.h.b16 %v401
    %v602 = vunpack.c.l.b16 %v402
    %v603 = vunpack.c.h.b16 %v402
    %v604 = vunpack.c.l.b16 %v403
    %v605 = vunpack.c.h.b16 %v403
    %v606 = vunpack.c.l.b16 %v404
    %v607 = vunpack.c.h.b16 %v404
    %v608 = vunpack.c.l.b16 %v405
    %v609 = vunpack.c.h.b16 %v405
    %v610 = vunpack.c.l.b16 %v406
    %v611 = vunpack.c.h.b16 %v406
    %v612 = vunpack.c.l.b16 %v407
    %v613 = vunpack.c.h.b16 %v407
    %v614 = vunpack.c.l.b16 %v408
    %v615 = vunpack.c.h.b16 %v408
    %v616 = vunpack.c.l.b16 %v409
    %v617 = vunpack.c.h.b16 %v409
    %v618 = vunpack.c.l.b16 %v410
    %v619 = vunpack.c.h.b16 %v410
    %v620 = vunpack.c.l.b16 %v411
    %v621 = vunpack.c.h.b16 %v411
    %v622 = vpack.c.b16 %v502, %v482
    %v623 = vpack.c.b16 %v503, %v483
    %v624 = vpack.c.b16 %v504, %v484
    %v625 = vpack.c.b16 %v505, %v485
    %v626 = vpack.c.b16 %v506, %v486
    %v627 = vpack.c.b16 %v507, %v487
    %v628 = vpack.c.b16 %v508, %v488
    %v629 = vpack.c.b16 %v509, %v489
    %v630 = vpack.c.b16 %v510, %v490
    %v631 = vpack.c.b16 %v511, %v491
    %v632 = vpack.c.b16 %v512, %v492
    %v633 = vpack.c.b16 %v513, %v493
    %v634 = vpack.c.b16 %v514, %v494
    %v635 = vpack.c.b16 %v515, %v495
    %v636 = vpack.c.b16 %v516, %v496
    %v637 = vpack.c.b16 %v517, %v497
    %v638 = vpack.c.b16 %v518, %v498
    %v639 = vpack.c.b16 %v519, %v499
    %v640 = vpack.c.b16 %v520, %v500
    %v641 = vpack.c.b16 %v521, %v501
    %v642 = vpack.c.b16 %v542, %v522
    %v643 = vpack.c.b16 %v543, %v523
    %v644 = vpack.c.b16 %v544, %v524
    %v645 = vpack.c.b16 %v545, %v525
    %v646 = vpack.c.b16 %v546, %v526
    %v647 = vpack.c.b16 %v547, %v527
    %v648 = vpack.c.b16 %v548, %v528
    %v649 = vpack.c.b16 %v549, %v529
    %v650 = vpack.c.b16 %v550, %v530
    %v651 = vpack.c.b16 %v551, %v531
    %v652 = vpack.c.b16 %v552, %v532
    %v653 = vpack.c.b16 %v553, %v533
    %v654 = vpack.c.b16 %v554, %v534
    %v655 = vpack.c.b16 %v555, %v535
    %v656 = vpack.c.b16 %v556, %v536
    %v657 = vpack.c.b16 %v557, %v537
    %v658 = vpack.c.b16 %v558, %v538
    %v659 = vpack.c.b16 %v559, %v539
    %v660 = vpack.c.b16 %v560, %v540
    %v661 = vpack.c.b16 %v561, %v541
    %v662 = vpack.c.b16 %v582, %v562
    %v663 = vpack.c.b16 %v583, %v563
    %v664 = vpack.c.b16 %v584, %v564
    %v665 = vpack.c.b16 %v585, %v565
    %v666 = vpack.c.b16 %v586, %v566
    %v667 = vpack.c.b16 %v587, %v567
    %v668 = vpack.c.b16 %v588, %v568
    %v669 = vpack.c.b16 %v589, %v569
    %v670 = vpack.c.b16 %v590, %v570
    %v671 = vpack.c.b16 %v591, %v571
    %v672 = vpack.c.b16 %v592, %v572
    %v673 = vpack.c.b16 %v593, %v573
    %v674 = vpack.c.b16 %v594, %v574
    %v675 = vpack.c.b16 %v595, %v575
    %v676 = vpack.c.b16 %v596, %v576
    %v677 = vpack.c.b16 %v597, %v577
    %v678 = vpack.c.b16 %v598, %v578
    %v679 = vpack.c.b16 %v599, %v579
    %v680 = vpack.c.b16 %v600, %v580
    %v681 = vpack.c.b16 %v601, %v581
    %v682 = vpack.c.b16 %v602, %v602
    %v683 = vpack.c.b16 %v603, %v603
    %v684 = vpack.c.b16 %v604, %v604
    %v685 = vpack.c.b16 %v605, %v605
    %v686 = vpack.c.b16 %v606, %v606
    %v687 = vpack.c.b16 %v607, %v607
    %v688 = vpack.c.b16 %v608, %v608
    %v689 = vpack.c.b16 %v609, %v609
    %v690 = vpack.c.b16 %v610, %v610
    %v691 = vpack.c.b16 %v611, %v611
    %v692 = vpack.c.b16 %v612, %v612
    %v693 = vpack.c.b16 %v613, %v613
    %v694 = vpack.c.b16 %v614, %v614
    %v695 = vpack.c.b16 %v615, %v615
    %v696 = vpack.c.b16 %v616, %v616
    %v697 = vpack.c.b16 %v617, %v617
    %v698 = vpack.c.b16 %v618, %v618
    %v699 = vpack.c.b16 %v619, %v619
    %v700 = vpack.c.b16 %v620, %v620
    %v701 = vpack.c.b16 %v621, %v621
    %v763 = vsel %vm68, %v341, 0
    %v766 = vsel %vm139, %v682, 0
    %v769 = vsel %vm139, %v683, 0
    %v772 = vsel %vm139, %v684, 0
    %v775 = vsel %vm139, %v685, 0
    %v778 = vsel %vm139, %v686, 0
    %v781 = vsel %vm139, %v687, 0
    %v784 = vsel %vm139, %v688, 0
    %v787 = vsel %vm139, %v689, 0
    %v790 = vsel %vm139, %v690, 0
    %v793 = vsel %vm139, %v691, 0
    %v796 = vsel %vm139, %v692, 0
    %v799 = vsel %vm139, %v693, 0
    %v802 = vsel %vm139, %v694, 0
    %v805 = vsel %vm139, %v695, 0
    %v808 = vsel %vm139, %v696, 0
    %v811 = vsel %vm139, %v697, 0
    %v814 = vsel %vm139, %v698, 0
    %v817 = vsel %vm139, %v699, 0
    %v820 = vsel %vm139, %v700, 0
    %v823 = vsel %vm139, %v701, 0
    %825 = vmatpush.bf16.msra.mxu0 0
    %826 = vmatpush.bf16.msra.mxu0 0
    %827 = vmatpush.bf16.msra.mxu0 0
    %828 = vmatpush.bf16.msra.mxu0 0
    %829 = vmatpush.bf16.msra.mxu0 %v766
    %830 = vmatpush.bf16.msra.mxu0 %v662
    %831 = vmatpush.bf16.msra.mxu0 %v642
    %832 = vmatpush.bf16.msra.mxu0 %v622
    %833 = vmatmul.bf16.gmra.mxu0 %v763
    %v834 = vpop.f32.mrf.mxu0
    %v835 = vadd.f32 0.0, %v834
    %v836 = vpop.f32.mrf.mxu0
    %837 = vdwg.mxu0
    %838 = vmatpush.bf16.msra.mxu0 0
    %839 = vmatpush.bf16.msra.mxu0 0
    %840 = vmatpush.bf16.msra.mxu0 0
    %841 = vmatpush.bf16.msra.mxu0 0
    %842 = vmatpush.bf16.msra.mxu0 %v769
    %843 = vmatpush.bf16.msra.mxu0 %v663
    %844 = vmatpush.bf16.msra.mxu0 %v643
    %845 = vmatpush.bf16.msra.mxu0 %v623
    %846 = vmatmul.bf16.gmra.mxu0 %v763
    %v847 = vpop.f32.mrf.mxu0
    %v848 = vadd.f32 0.0, %v847
    %v849 = vpop.f32.mrf.mxu0
    %850 = vdwg.mxu0
    %851 = vmatpush.bf16.msra.mxu0 0
    %852 = vmatpush.bf16.msra.mxu0 0
    %853 = vmatpush.bf16.msra.mxu0 0
    %854 = vmatpush.bf16.msra.mxu0 0
    %855 = vmatpush.bf16.msra.mxu0 %v772
    %856 = vmatpush.bf16.msra.mxu0 %v664
    %857 = vmatpush.bf16.msra.mxu0 %v644
    %858 = vmatpush.bf16.msra.mxu0 %v624
    %859 = vmatmul.bf16.gmra.mxu0 %v763
    %v860 = vpop.f32.mrf.mxu0
    %v861 = vadd.f32 0.0, %v860
    %v862 = vpop.f32.mrf.mxu0
    %863 = vdwg.mxu0
    %864 = vmatpush.bf16.msra.mxu0 0
    %865 = vmatpush.bf16.msra.mxu0 0
    %866 = vmatpush.bf16.msra.mxu0 0
    %867 = vmatpush.bf16.msra.mxu0 0
    %868 = vmatpush.bf16.msra.mxu0 %v775
    %869 = vmatpush.bf16.msra.mxu0 %v665
    %870 = vmatpush.bf16.msra.mxu0 %v645
    %871 = vmatpush.bf16.msra.mxu0 %v625
    %872 = vmatmul.bf16.gmra.mxu0 %v763
    %v873 = vpop.f32.mrf.mxu0
    %v874 = vadd.f32 0.0, %v873
    %v875 = vpop.f32.mrf.mxu0
    %876 = vdwg.mxu0
    %877 = vmatpush.bf16.msra.mxu0 0
    %878 = vmatpush.bf16.msra.mxu0 0
    %879 = vmatpush.bf16.msra.mxu0 0
    %880 = vmatpush.bf16.msra.mxu0 0
    %881 = vmatpush.bf16.msra.mxu0 %v778
    %882 = vmatpush.bf16.msra.mxu0 %v666
    %883 = vmatpush.bf16.msra.mxu0 %v646
    %884 = vmatpush.bf16.msra.mxu0 %v626
    %885 = vmatmul.bf16.gmra.mxu0 %v763
    %v886 = vpop.f32.mrf.mxu0
    %v887 = vadd.f32 0.0, %v886
    %v888 = vpop.f32.mrf.mxu0
    %889 = vdwg.mxu0
    %890 = vmatpush.bf16.msra.mxu0 0
    %891 = vmatpush.bf16.msra.mxu0 0
    %892 = vmatpush.bf16.msra.mxu0 0
    %893 = vmatpush.bf16.msra.mxu0 0
    %894 = vmatpush.bf16.msra.mxu0 %v781
    %895 = vmatpush.bf16.msra.mxu0 %v667
    %896 = vmatpush.bf16.msra.mxu0 %v647
    %897 = vmatpush.bf16.msra.mxu0 %v627
    %898 = vmatmul.bf16.gmra.mxu0 %v763
    %v899 = vpop.f32.mrf.mxu0
    %v900 = vadd.f32 0.0, %v899
    %v901 = vpop.f32.mrf.mxu0
    %902 = vdwg.mxu0
    %903 = vmatpush.bf16.msra.mxu0 0
    %904 = vmatpush.bf16.msra.mxu0 0
    %905 = vmatpush.bf16.msra.mxu0 0
    %906 = vmatpush.bf16.msra.mxu0 0
    %907 = vmatpush.bf16.msra.mxu0 %v784
    %908 = vmatpush.bf16.msra.mxu0 %v668
    %909 = vmatpush.bf16.msra.mxu0 %v648
    %910 = vmatpush.bf16.msra.mxu0 %v628
    %911 = vmatmul.bf16.gmra.mxu0 %v763
    %v912 = vpop.f32.mrf.mxu0
    %v913 = vadd.f32 0.0, %v912
    %v914 = vpop.f32.mrf.mxu0
    %915 = vdwg.mxu0
    %916 = vmatpush.bf16.msra.mxu0 0
    %917 = vmatpush.bf16.msra.mxu0 0
    %918 = vmatpush.bf16.msra.mxu0 0
    %919 = vmatpush.bf16.msra.mxu0 0
    %920 = vmatpush.bf16.msra.mxu0 %v787
    %921 = vmatpush.bf16.msra.mxu0 %v669
    %922 = vmatpush.bf16.msra.mxu0 %v649
    %923 = vmatpush.bf16.msra.mxu0 %v629
    %924 = vmatmul.bf16.gmra.mxu0 %v763
    %v925 = vpop.f32.mrf.mxu0
    %v926 = vadd.f32 0.0, %v925
    %v927 = vpop.f32.mrf.mxu0
    %928 = vdwg.mxu0
    %929 = vmatpush.bf16.msra.mxu0 0
    %930 = vmatpush.bf16.msra.mxu0 0
    %931 = vmatpush.bf16.msra.mxu0 0
    %932 = vmatpush.bf16.msra.mxu0 0
    %933 = vmatpush.bf16.msra.mxu0 %v790
    %934 = vmatpush.bf16.msra.mxu0 %v670
    %935 = vmatpush.bf16.msra.mxu0 %v650
    %936 = vmatpush.bf16.msra.mxu0 %v630
    %937 = vmatmul.bf16.gmra.mxu0 %v763
    %v938 = vpop.f32.mrf.mxu0
    %v939 = vadd.f32 0.0, %v938
    %v940 = vpop.f32.mrf.mxu0
    %941 = vdwg.mxu0
    %942 = vmatpush.bf16.msra.mxu0 0
    %943 = vmatpush.bf16.msra.mxu0 0
    %944 = vmatpush.bf16.msra.mxu0 0
    %945 = vmatpush.bf16.msra.mxu0 0
    %946 = vmatpush.bf16.msra.mxu0 %v793
    %947 = vmatpush.bf16.msra.mxu0 %v671
    %948 = vmatpush.bf16.msra.mxu0 %v651
    %949 = vmatpush.bf16.msra.mxu0 %v631
    %950 = vmatmul.bf16.gmra.mxu0 %v763
    %v951 = vpop.f32.mrf.mxu0
    %v952 = vadd.f32 0.0, %v951
    %v953 = vpop.f32.mrf.mxu0
    %954 = vdwg.mxu0
    %955 = vmatpush.bf16.msra.mxu0 0
    %956 = vmatpush.bf16.msra.mxu0 0
    %957 = vmatpush.bf16.msra.mxu0 0
    %958 = vmatpush.bf16.msra.mxu0 0
    %959 = vmatpush.bf16.msra.mxu0 %v796
    %960 = vmatpush.bf16.msra.mxu0 %v672
    %961 = vmatpush.bf16.msra.mxu0 %v652
    %962 = vmatpush.bf16.msra.mxu0 %v632
    %963 = vmatmul.bf16.gmra.mxu0 %v763
    %v964 = vpop.f32.mrf.mxu0
    %v965 = vadd.f32 0.0, %v964
    %v966 = vpop.f32.mrf.mxu0
    %967 = vdwg.mxu0
    %968 = vmatpush.bf16.msra.mxu0 0
    %969 = vmatpush.bf16.msra.mxu0 0
    %970 = vmatpush.bf16.msra.mxu0 0
    %971 = vmatpush.bf16.msra.mxu0 0
    %972 = vmatpush.bf16.msra.mxu0 %v799
    %973 = vmatpush.bf16.msra.mxu0 %v673
    %974 = vmatpush.bf16.msra.mxu0 %v653
    %975 = vmatpush.bf16.msra.mxu0 %v633
    %976 = vmatmul.bf16.gmra.mxu0 %v763
    %v977 = vpop.f32.mrf.mxu0
    %v978 = vadd.f32 0.0, %v977
    %v979 = vpop.f32.mrf.mxu0
    %980 = vdwg.mxu0
    %981 = vmatpush.bf16.msra.mxu0 0
    %982 = vmatpush.bf16.msra.mxu0 0
    %983 = vmatpush.bf16.msra.mxu0 0
    %984 = vmatpush.bf16.msra.mxu0 0
    %985 = vmatpush.bf16.msra.mxu0 %v802
    %986 = vmatpush.bf16.msra.mxu0 %v674
    %987 = vmatpush.bf16.msra.mxu0 %v654
    %988 = vmatpush.bf16.msra.mxu0 %v634
    %989 = vmatmul.bf16.gmra.mxu0 %v763
    %v990 = vpop.f32.mrf.mxu0
    %v991 = vadd.f32 0.0, %v990
    %v992 = vpop.f32.mrf.mxu0
    %993 = vdwg.mxu0
    %994 = vmatpush.bf16.msra.mxu0 0
    %995 = vmatpush.bf16.msra.mxu0 0
    %996 = vmatpush.bf16.msra.mxu0 0
    %997 = vmatpush.bf16.msra.mxu0 0
    %998 = vmatpush.bf16.msra.mxu0 %v805
    %999 = vmatpush.bf16.msra.mxu0 %v675
    %1000 = vmatpush.bf16.msra.mxu0 %v655
    %1001 = vmatpush.bf16.msra.mxu0 %v635
    %1002 = vmatmul.bf16.gmra.mxu0 %v763
    %v1003 = vpop.f32.mrf.mxu0
    %v1004 = vadd.f32 0.0, %v1003
    %v1005 = vpop.f32.mrf.mxu0
    %1006 = vdwg.mxu0
    %1007 = vmatpush.bf16.msra.mxu0 0
    %1008 = vmatpush.bf16.msra.mxu0 0
    %1009 = vmatpush.bf16.msra.mxu0 0
    %1010 = vmatpush.bf16.msra.mxu0 0
    %1011 = vmatpush.bf16.msra.mxu0 %v808
    %1012 = vmatpush.bf16.msra.mxu0 %v676
    %1013 = vmatpush.bf16.msra.mxu0 %v656
    %1014 = vmatpush.bf16.msra.mxu0 %v636
    %1015 = vmatmul.bf16.gmra.mxu0 %v763
    %v1016 = vpop.f32.mrf.mxu0
    %v1017 = vadd.f32 0.0, %v1016
    %v1018 = vpop.f32.mrf.mxu0
    %1019 = vdwg.mxu0
    %1020 = vmatpush.bf16.msra.mxu0 0
    %1021 = vmatpush.bf16.msra.mxu0 0
    %1022 = vmatpush.bf16.msra.mxu0 0
    %1023 = vmatpush.bf16.msra.mxu0 0
    %1024 = vmatpush.bf16.msra.mxu0 %v811
    %1025 = vmatpush.bf16.msra.mxu0 %v677
    %1026 = vmatpush.bf16.msra.mxu0 %v657
    %1027 = vmatpush.bf16.msra.mxu0 %v637
    %1028 = vmatmul.bf16.gmra.mxu0 %v763
    %v1029 = vpop.f32.mrf.mxu0
    %v1030 = vadd.f32 0.0, %v1029
    %v1031 = vpop.f32.mrf.mxu0
    %1032 = vdwg.mxu0
    %1033 = vmatpush.bf16.msra.mxu0 0
    %1034 = vmatpush.bf16.msra.mxu0 0
    %1035 = vmatpush.bf16.msra.mxu0 0
    %1036 = vmatpush.bf16.msra.mxu0 0
    %1037 = vmatpush.bf16.msra.mxu0 %v814
    %1038 = vmatpush.bf16.msra.mxu0 %v678
    %1039 = vmatpush.bf16.msra.mxu0 %v658
    %1040 = vmatpush.bf16.msra.mxu0 %v638
    %1041 = vmatmul.bf16.gmra.mxu0 %v763
    %v1042 = vpop.f32.mrf.mxu0
    %v1043 = vadd.f32 0.0, %v1042
    %v1044 = vpop.f32.mrf.mxu0
    %1045 = vdwg.mxu0
    %1046 = vmatpush.bf16.msra.mxu0 0
    %1047 = vmatpush.bf16.msra.mxu0 0
    %1048 = vmatpush.bf16.msra.mxu0 0
    %1049 = vmatpush.bf16.msra.mxu0 0
    %1050 = vmatpush.bf16.msra.mxu0 %v817
    %1051 = vmatpush.bf16.msra.mxu0 %v679
    %1052 = vmatpush.bf16.msra.mxu0 %v659
    %1053 = vmatpush.bf16.msra.mxu0 %v639
    %1054 = vmatmul.bf16.gmra.mxu0 %v763
    %v1055 = vpop.f32.mrf.mxu0
    %v1056 = vadd.f32 0.0, %v1055
    %v1057 = vpop.f32.mrf.mxu0
    %1058 = vdwg.mxu0
    %1059 = vmatpush.bf16.msra.mxu0 0
    %1060 = vmatpush.bf16.msra.mxu0 0
    %1061 = vmatpush.bf16.msra.mxu0 0
    %1062 = vmatpush.bf16.msra.mxu0 0
    %1063 = vmatpush.bf16.msra.mxu0 %v820
    %1064 = vmatpush.bf16.msra.mxu0 %v680
    %1065 = vmatpush.bf16.msra.mxu0 %v660
    %1066 = vmatpush.bf16.msra.mxu0 %v640
    %1067 = vmatmul.bf16.gmra.mxu0 %v763
    %v1068 = vpop.f32.mrf.mxu0
    %v1069 = vadd.f32 0.0, %v1068
    %v1070 = vpop.f32.mrf.mxu0
    %1071 = vdwg.mxu0
    %1072 = vmatpush.bf16.msra.mxu0 0
    %1073 = vmatpush.bf16.msra.mxu0 0
    %1074 = vmatpush.bf16.msra.mxu0 0
    %1075 = vmatpush.bf16.msra.mxu0 0
    %1076 = vmatpush.bf16.msra.mxu0 %v823
    %1077 = vmatpush.bf16.msra.mxu0 %v681
    %1078 = vmatpush.bf16.msra.mxu0 %v661
    %1079 = vmatpush.bf16.msra.mxu0 %v641
    %1080 = vmatmul.bf16.gmra.mxu0 %v763
    %v1081 = vpop.f32.mrf.mxu0
    %v1082 = vadd.f32 0.0, %v1081
    %v1083 = vpop.f32.mrf.mxu0
    %1084 = vdwg.mxu0
    %v1085 = vmul.f32 %v835, 0.5
    %v1086 = vmul.f32 %v848, 0.5
    %v1087 = vmul.f32 %v861, 0.5
    %v1088 = vmul.f32 %v874, 0.5
    %v1089 = vmul.f32 %v887, 0.5
    %v1090 = vmul.f32 %v900, 0.5
    %v1091 = vmul.f32 %v913, 0.5
    %v1092 = vmul.f32 %v926, 0.5
    %v1093 = vmul.f32 %v939, 0.5
    %v1094 = vmul.f32 %v952, 0.5
    %v1095 = vmul.f32 %v965, 0.5
    %v1096 = vmul.f32 %v978, 0.5
    %v1097 = vmul.f32 %v991, 0.5
    %v1098 = vmul.f32 %v1004, 0.5
    %v1099 = vmul.f32 %v1017, 0.5
    %v1100 = vmul.f32 %v1030, 0.5
    %v1101 = vmul.f32 %v1043, 0.5
    %v1102 = vmul.f32 %v1056, 0.5
    %v1103 = vmul.f32 %v1069, 0.5
    %v1104 = vmul.f32 %v1082, 0.5
    %v1105 = vtanh.pop %v1085
    %v1106 = vtanh.pop %v1086
    %v1107 = vtanh.pop %v1087
    %v1108 = vtanh.pop %v1088
    %v1109 = vtanh.pop %v1089
    %v1110 = vtanh.pop %v1090
    %v1111 = vtanh.pop %v1091
    %v1112 = vtanh.pop %v1092
    %v1113 = vtanh.pop %v1093
    %v1114 = vtanh.pop %v1094
    %v1115 = vtanh.pop %v1095
    %v1116 = vtanh.pop %v1096
    %v1117 = vtanh.pop %v1097
    %v1118 = vtanh.pop %v1098
    %v1119 = vtanh.pop %v1099
    %v1120 = vtanh.pop %v1100
    %v1121 = vtanh.pop %v1101
    %v1122 = vtanh.pop %v1102
    %v1123 = vtanh.pop %v1103
    %v1124 = vtanh.pop %v1104
    %v1125 = vmul.f32 %v1105, 0.5
    %v1126 = vmul.f32 %v1106, 0.5
    %v1127 = vmul.f32 %v1107, 0.5
    %v1128 = vmul.f32 %v1108, 0.5
    %v1129 = vmul.f32 %v1109, 0.5
    %v1130 = vmul.f32 %v1110, 0.5
    %v1131 = vmul.f32 %v1111, 0.5
    %v1132 = vmul.f32 %v1112, 0.5
    %v1133 = vmul.f32 %v1113, 0.5
    %v1134 = vmul.f32 %v1114, 0.5
    %v1135 = vmul.f32 %v1115, 0.5
    %v1136 = vmul.f32 %v1116, 0.5
    %v1137 = vmul.f32 %v1117, 0.5
    %v1138 = vmul.f32 %v1118, 0.5
    %v1139 = vmul.f32 %v1119, 0.5
    %v1140 = vmul.f32 %v1120, 0.5
    %v1141 = vmul.f32 %v1121, 0.5
    %v1142 = vmul.f32 %v1122, 0.5
    %v1143 = vmul.f32 %v1123, 0.5
    %v1144 = vmul.f32 %v1124, 0.5
    %v1145 = vadd.f32 %v1125, 0.5
    %v1146 = vadd.f32 %v1126, 0.5
    %v1147 = vadd.f32 %v1127, 0.5
    %v1148 = vadd.f32 %v1128, 0.5
    %v1149 = vadd.f32 %v1129, 0.5
    %v1150 = vadd.f32 %v1130, 0.5
    %v1151 = vadd.f32 %v1131, 0.5
    %v1152 = vadd.f32 %v1132, 0.5
    %v1153 = vadd.f32 %v1133, 0.5
    %v1154 = vadd.f32 %v1134, 0.5
    %v1155 = vadd.f32 %v1135, 0.5
    %v1156 = vadd.f32 %v1136, 0.5
    %v1157 = vadd.f32 %v1137, 0.5
    %v1158 = vadd.f32 %v1138, 0.5
    %v1159 = vadd.f32 %v1139, 0.5
    %v1160 = vadd.f32 %v1140, 0.5
    %v1161 = vadd.f32 %v1141, 0.5
    %v1162 = vadd.f32 %v1142, 0.5
    %v1163 = vadd.f32 %v1143, 0.5
    %v1164 = vadd.f32 %v1144, 0.5
    %1165 = vst [vmem:[%s5] sm:$0xff] %v1145
    %1166 = vst [vmem:[%s5 + $0x8] sm:$0xff] %v1146
    %1167 = vst [vmem:[%s5 + $0x10] sm:$0xff] %v1147
    %1168 = vst [vmem:[%s5 + $0x18] sm:$0xff] %v1148
    %1169 = vst [vmem:[%s5 + $0x20] sm:$0xff] %v1149
    %1170 = vst [vmem:[%s5 + $0x28] sm:$0xff] %v1150
    %1171 = vst [vmem:[%s5 + $0x30] sm:$0xff] %v1151
    %1172 = vst [vmem:[%s5 + $0x38] sm:$0xff] %v1152
    %1173 = vst [vmem:[%s5 + $0x40] sm:$0xff] %v1153
    %1174 = vst [vmem:[%s5 + $0x48] sm:$0xff] %v1154
    %1175 = vst [vmem:[%s5 + $0x50] sm:$0xff] %v1155
    %1176 = vst [vmem:[%s5 + $0x58] sm:$0xff] %v1156
    %1177 = vst [vmem:[%s5 + $0x60] sm:$0xff] %v1157
    %1178 = vst [vmem:[%s5 + $0x68] sm:$0xff] %v1158
    %1179 = vst [vmem:[%s5 + $0x70] sm:$0xff] %v1159
    %1180 = vst [vmem:[%s5 + $0x78] sm:$0xff] %v1160
    %1181 = vst [vmem:[%s5 + $0x80] sm:$0xff] %v1161
    %1182 = vst [vmem:[%s5 + $0x88] sm:$0xff] %v1162
    %1183 = vst [vmem:[%s5 + $0x90] sm:$0xff] %v1163
    %1184 = vst [vmem:[%s5 + $0x98] sm:$0xff] %v1164
    // Predicated region
    $region26: #{net_forward.1} parent=1 // pred_check
      _
    $region27: #{net_forward.1} parent=1 // pred_check_branch
      %1186 = sbr.rel (0) target = $region29
    $region28: #{net_forward.1} parent=1 // pred_region
      _
    $region29: #{net_forward.1} parent=1 // pred_fallthru
      _
    // Predicated region
    $region30: #{net_forward.1} parent=1 // pred_check
      _
    $region31: #{net_forward.1} parent=1 // pred_check_branch
      %1188 = sbr.rel (0) target = $region33
    $region32: #{net_forward.1} parent=1 // pred_region
      _
    $region33: #{net_forward.1} parent=1 // pred_fallthru
      _
    %1189 = vsyncpa [#allocation3], 1

</llo_original>
